<compile_context>
chip_gen: v7x
topology: tpu7x:2x2x1
jax: 0.10.0
libtpu: 0.0.40
codegen_flags: <defaults>
</compile_context>

<pallas_src>
import functools

import jax
import jax.numpy as jnp
from jax import lax
from jax.experimental import pallas as pl
from jax.experimental.pallas import tpu as pltpu


# ----------------------------------------------------------------------------
# helpers
# ----------------------------------------------------------------------------
def _round_up(v, m):
    return ((v + m - 1) // m) * m


def _cdiv(a, b):
    return -(-a // b)


def _pad2(a, rows, cols):
    r, c = a.shape
    return jnp.pad(a, ((0, rows - r), (0, cols - c)))


def _apply_act(y, activation):
    if activation == "relu":
        return jnp.maximum(y, 0.0)
    if activation == "sigmoid":
        return jax.nn.sigmoid(y)
    return y


P_CHUNKS = 2  # parallel edge chunks (one per TensorCore on v7x; harmless elsewhere)


# ----------------------------------------------------------------------------
# Kernel A: edge update (fused big-K matmul) + per-chunk scatter aggregation
#   grid = (P_CHUNKS [parallel], edge_tiles [arbitrary])
# ----------------------------------------------------------------------------
def _edge_agg_kernel(x_ref, e_ref, s_col_ref, r_col_ref, r_row_ref,
                     we_ref, be_ref, wn_ref, bn_ref,
                     msg_ref, pacc_ref,
                     rhs_sc,
                     *, edge_act, fep):
    f32 = jnp.float32
    bf16 = jnp.bfloat16
    t = pl.program_id(1)
    TE = e_ref.shape[0]
    Np = x_ref.shape[0]

    @pl.when(t == 0)
    def _():
        # Build the fused-K RHS  [We ; (x @ Wn + bn)]  once per chunk, and zero
        # this chunk's node accumulator.
        rhs_sc[0:fep, :] = we_ref[...]
        xp = jnp.dot(x_ref[...], wn_ref[...], preferred_element_type=f32) + bn_ref[...]
        rhs_sc[fep:fep + Np, :] = xp.astype(bf16)
        pacc_ref[...] = jnp.zeros_like(pacc_ref)

    # combined endpoint-gather one-hot, built directly in bf16
    # (padded edges carry sender/receiver = -1 -> all-zero rows)
    node_iota = lax.broadcasted_iota(jnp.int32, (TE, Np), 1)
    gather_oh = ((s_col_ref[...] == node_iota).astype(bf16)
                 + (r_col_ref[...] == node_iota).astype(bf16))          # (TE, Np)

    # fused edge matmul: [e | onehot] @ [We ; xp]   (K = FEp + Np)
    lhs = jnp.concatenate([e_ref[...], gather_oh], axis=1)              # (TE, FEp+Np)
    m = jnp.dot(lhs, rhs_sc[...], preferred_element_type=f32) + be_ref[...]
    m = _apply_act(m, edge_act)
    msg_ref[...] = m.astype(msg_ref.dtype)                              # bf16 writeback

    # scatter-sum into this chunk's node accumulator (padded lanes of m only
    # ever feed padded lanes downstream; real outputs are unaffected)
    edge_node_iota = lax.broadcasted_iota(jnp.int32, (Np, TE), 0)
    scat_oh = (r_row_ref[...] == edge_node_iota).astype(bf16)           # (Np, TE)
    pacc_ref[...] += jnp.dot(scat_oh, m.astype(bf16),
                             preferred_element_type=f32)


# ----------------------------------------------------------------------------
# Kernel B: reduce partial accumulators + node update + selection
#   grid = (node_tiles [parallel])
# ----------------------------------------------------------------------------
def _node_sel_kernel(pacc_ref, invdeg_ref, wv_ref, bv_ref, ws_ref, bs_ref,
                     node_ref, sel_ref, *, node_act, node_norm, n_valid_h):
    f32 = jnp.float32
    bf16 = jnp.bfloat16

    acc = jnp.sum(pacc_ref[...], axis=0)                    # reduce P chunks -> (TN, HP)
    agg = acc * invdeg_ref[...]                              # exact mean over in-edges

    y = jnp.dot(agg.astype(bf16), wv_ref[...], preferred_element_type=f32) + bv_ref[...]
    y = _apply_act(y, node_act)
    if node_norm:
        # zero the padded lanes so the L2 norm only sees the logical features
        lane = lax.broadcasted_iota(jnp.int32, y.shape, 1)
        y = jnp.where(lane < n_valid_h, y, 0.0)
        ss = jnp.sum(y * y, axis=-1, keepdims=True)
        y = y * lax.rsqrt(jnp.maximum(ss, 1e-24))             # EUP rsqrt
    node_ref[...] = y.astype(node_ref.dtype)

    s = jnp.dot(y.astype(bf16), ws_ref[...], preferred_element_type=f32) + bs_ref[...]
    sel_ref[...] = s.astype(sel_ref.dtype)


# ----------------------------------------------------------------------------
# Wrapper: padding / casting / two pallas_calls
# ----------------------------------------------------------------------------
def graph_network_forward(params, block_params, x, edge_attr, senders, receivers,
                          *, edge_tile=512):
    ep = block_params["edge_params"]
    np_ = block_params["node_params"]

    N, Fn = x.shape
    E, Fe = edge_attr.shape
    H = params["node_w"].shape[1]
    S = params["sel_w"].shape[1]

    HP = _round_up(H, 128)
    SP = _round_up(S, 128)
    FEp = _round_up(Fe, 128)
    FNp = _round_up(Fn, 128)
    Np = _round_up(N, 128)

    # ---- edge tiling: P parallel chunks x ET tiles x TE edges ---------------
    # cap the tile so each in-kernel (TE, Np) bf16 one-hot stays ~<= 2 MiB
    # (sized with v7x's 64 MiB physical / 32 MiB default scoped VMEM in mind)
    te_cap = max(128, ((2 * 1024 * 1024) // (2 * Np)) // 128 * 128)
    TE = max(128, min(edge_tile, te_cap, _round_up(max(_cdiv(E, P_CHUNKS), 1), 128)))
    ET = max(1, _cdiv(E, P_CHUNKS * TE))
    Ep = P_CHUNKS * ET * TE

    # ---- node tiling for the node/selection kernel ---------------------------
    if Np <= 1024:
        TN = Np
    else:
        TN = next(c for c in (1024, 512, 256, 128) if Np % c == 0)
    NT = Np // TN

    bf16 = jnp.bfloat16
    f32 = jnp.float32

    x_p = _pad2(x, Np, FNp).astype(bf16)
    e_p = _pad2(edge_attr, Ep, FEp).astype(bf16)

    # padded edges get sender/receiver = -1 -> they never match any node index
    # (note: indices >= N are silently dropped as well; inputs assumed valid)
    idx_pad = jnp.full((Ep,), -1, jnp.int32)
    s_flat = idx_pad.at[:E].set(senders.astype(jnp.int32))
    r_flat = idx_pad.at[:E].set(receivers.astype(jnp.int32))
    s_col = s_flat.reshape(Ep, 1)
    r_col = r_flat.reshape(Ep, 1)
    r_row = r_flat.reshape(1, Ep)

    # exact 1/deg via scatter-add in the wrapper (cheap XLA op, tighter accuracy)
    deg = jnp.zeros((Np,), f32).at[receivers.astype(jnp.int32)].add(1.0)
    inv_deg = (1.0 / jnp.maximum(deg, 1.0)).reshape(Np, 1)

    # projection matrices: bf16 for the MXU, zero-padded to lane-dense widths
    we = _pad2(params["edge_w_e"], FEp, HP).astype(bf16)
    be = _pad2(params["edge_b_e"].reshape(1, -1), 1, HP).astype(f32)
    wn = _pad2(params["edge_w_n"], FNp, HP).astype(bf16)
    bn = _pad2(params["edge_b_n"].reshape(1, -1), 1, HP).astype(f32)
    wv = _pad2(params["node_w"], HP, HP).astype(bf16)
    bv = _pad2(params["node_b"].reshape(1, -1), 1, HP).astype(f32)
    ws = _pad2(params["sel_w"], HP, SP).astype(bf16)
    bs = _pad2(params["sel_b"].reshape(1, -1), 1, SP).astype(f32)

    # ---- kernel A: edge update + per-chunk aggregation ----------------------
    kernel_a = functools.partial(_edge_agg_kernel,
                                 edge_act=ep.get("activation", None), fep=FEp)

    flops_a = (2 * Ep * (FEp + Np) * HP          # fused edge matmul
               + 2 * Np * Ep * HP                # scatter-aggregation matmul
               + 2 * P_CHUNKS * Np * FNp * HP)   # node projection (per chunk)
    bytes_a = (x_p.size * 2 + e_p.size * 2
               + (s_col.size + r_col.size + r_row.size) * 4
               + (we.size + wn.size) * 2 + (be.size + bn.size) * 4
               + Ep * HP * 2 + P_CHUNKS * Np * HP * 4)

    msgs, pacc = pl.pallas_call(
        kernel_a,
        out_shape=(jax.ShapeDtypeStruct((Ep, HP), bf16),
                   jax.ShapeDtypeStruct((P_CHUNKS * Np, HP), f32)),
        grid_spec=pltpu.PrefetchScalarGridSpec(
            num_scalar_prefetch=0,
            grid=(P_CHUNKS, ET),
            in_specs=[
                pl.BlockSpec((Np, FNp), lambda p, t: (0, 0)),            # x
                pl.BlockSpec((TE, FEp), lambda p, t: (p * ET + t, 0)),   # edge_attr
                pl.BlockSpec((TE, 1),   lambda p, t: (p * ET + t, 0)),   # senders
                pl.BlockSpec((TE, 1),   lambda p, t: (p * ET + t, 0)),   # receivers (col)
                pl.BlockSpec((1, TE),   lambda p, t: (0, p * ET + t)),   # receivers (row)
                pl.BlockSpec((FEp, HP), lambda p, t: (0, 0)),            # We
                pl.BlockSpec((1, HP),   lambda p, t: (0, 0)),            # be
                pl.BlockSpec((FNp, HP), lambda p, t: (0, 0)),            # Wn
                pl.BlockSpec((1, HP),   lambda p, t: (0, 0)),            # bn
            ],
            out_specs=(
                pl.BlockSpec((TE, HP), lambda p, t: (p * ET + t, 0)),    # messages
                pl.BlockSpec((Np, HP), lambda p, t: (p, 0)),             # partial acc
            ),
            scratch_shapes=[pltpu.VMEM((FEp + Np, HP), bf16)],           # [We ; xp]
        ),
        compiler_params=pltpu.CompilerParams(
            dimension_semantics=("parallel", "arbitrary"),
            vmem_limit_bytes=64 * 1024 * 1024),
        cost_estimate=pl.CostEstimate(flops=flops_a, transcendentals=0,
                                      bytes_accessed=bytes_a),
    )(x_p, e_p, s_col, r_col, r_row, we, be, wn, bn)

    # ---- kernel B: reduce partials + node update + selection -----------------
    pacc3 = pacc.reshape(P_CHUNKS, Np, HP)   # free, contiguous reshape

    kernel_b = functools.partial(_node_sel_kernel,
                                 node_act=np_.get("activation", None),
                                 node_norm=np_.get("normalize", False),
                                 n_valid_h=H)

    flops_b = 2 * Np * HP * HP + 2 * Np * HP * SP + 6 * Np * HP
    bytes_b = (P_CHUNKS * Np * HP * 4 + Np * 4
               + (wv.size + ws.size) * 2 + (bv.size + bs.size) * 4
               + Np * HP * 2 + Np * SP * 2)

    nodes, sel = pl.pallas_call(
        kernel_b,
        out_shape=(jax.ShapeDtypeStruct((Np, HP), bf16),
                   jax.ShapeDtypeStruct((Np, SP), bf16)),
        grid_spec=pltpu.PrefetchScalarGridSpec(
            num_scalar_prefetch=0,
            grid=(NT,),
            in_specs=[
                pl.BlockSpec((P_CHUNKS, TN, HP), lambda n: (0, n, 0)),   # partial acc
                pl.BlockSpec((TN, 1),  lambda n: (n, 0)),                # 1/deg
                pl.BlockSpec((HP, HP), lambda n: (0, 0)),                # Wv
                pl.BlockSpec((1, HP),  lambda n: (0, 0)),                # bv
                pl.BlockSpec((HP, SP), lambda n: (0, 0)),                # Ws
                pl.BlockSpec((1, SP),  lambda n: (0, 0)),                # bs
            ],
            out_specs=(
                pl.BlockSpec((TN, HP), lambda n: (n, 0)),
                pl.BlockSpec((TN, SP), lambda n: (n, 0)),
            ),
        ),
        compiler_params=pltpu.CompilerParams(
            dimension_semantics=("parallel",),
            vmem_limit_bytes=64 * 1024 * 1024),
        cost_estimate=pl.CostEstimate(flops=flops_b, transcendentals=Np,
                                      bytes_accessed=bytes_b),
    )(pacc3, inv_deg, wv, bv, ws, bs)

    return {
        "nodes": nodes[:N, :H],
        "edges": msgs[:E, :H],
        "selection": sel[:N, :S],
    }


# ----------------------------------------------------------------------------
# Parameter init (mirrors nn.Linear defaults) + pure-JAX reference
# ----------------------------------------------------------------------------
def init_linear(key, fan_in, fan_out):
    k1, k2 = jax.random.split(key)
    lim = 1.0 / jnp.sqrt(float(fan_in))
    w = jax.random.uniform(k1, (fan_in, fan_out), jnp.float32, -lim, lim)
    b = jax.random.uniform(k2, (fan_out,), jnp.float32, -lim, lim)
    return w, b


def init_graph_network(key, block_params):
    params = {}
    keys = jax.random.split(key, 4)
    ep = block_params["edge_params"]
    params["edge_w_e"], params["edge_b_e"] = init_linear(
        keys[0], ep["n_feat_edge"], ep["n_out"])
    params["edge_w_n"], params["edge_b_n"] = init_linear(
        keys[1], ep["n_feat_node"], ep["n_out"])
    np_ = block_params["node_params"]
    params["node_w"], params["node_b"] = init_linear(
        keys[2], np_["n_feat"], np_["n_out"])
    sp = block_params["selection_params"]
    params["sel_w"], params["sel_b"] = init_linear(
        keys[3], sp["n_feat"], sp["n_out"])
    return params


def reference_forward(params, block_params, x, edge_attr, senders, receivers):
    """Pure-JAX f32 reference with identical semantics (relaxed-tolerance check)."""
    ep = block_params["edge_params"]
    np_ = block_params["node_params"]
    xp = x @ params["edge_w_n"] + params["edge_b_n"]
    m = edge_attr @ params["edge_w_e"] + params["edge_b_e"] + xp[senders] + xp[receivers]
    m = _apply_act(m, ep.get("activation", None))
    N = x.shape[0]
    deg = jnp.zeros((N,), jnp.float32).at[receivers].add(1.0)
    agg = jnp.zeros((N, m.shape[1]), jnp.float32).at[receivers].add(m)
    agg = agg / jnp.maximum(deg, 1.0)[:, None]
    y = agg @ params["node_w"] + params["node_b"]
    y = _apply_act(y, np_.get("activation", None))
    if np_.get("normalize", False):
        nrm = jnp.sqrt(jnp.sum(y * y, axis=-1, keepdims=True))
        y = y / jnp.maximum(nrm, 1e-12)
    sel = y @ params["sel_w"] + params["sel_b"]
    return {"nodes": y, "edges": m, "selection": sel}


# ----------------------------------------------------------------------------
if __name__ == "__main__":
    N_NODES, N_EDGES = 8, 16
    F_NODE, F_EDGE, HIDDEN, N_SEL = 32, 16, 32, 8

    block_params = {
        "edge_params": {"n_feat_edge": F_EDGE, "n_feat_node": F_NODE,
                        "n_out": HIDDEN, "project": True, "bias": True,
                        "activation": "relu"},
        "node_params": {"n_feat": HIDDEN, "n_out": HIDDEN, "project": True,
                        "bias": True, "activation": "relu", "normalize": True},
        "selection_params": {"n_feat": HIDDEN, "n_out": N_SEL, "project": True,
                             "bias": True},
    }

    key = jax.random.PRNGKey(0)
    k_param, k_x, k_e, k_s, k_r = jax.random.split(key, 5)

    params = init_graph_network(k_param, block_params)

    x = jax.random.normal(k_x, (N_NODES, F_NODE), jnp.float32)
    edge_attr = jax.random.normal(k_e, (N_EDGES, F_EDGE), jnp.float32)
    senders = jax.random.randint(k_s, (N_EDGES,), 0, N_NODES)
    receivers = jax.random.randint(k_r, (N_EDGES,), 0, N_NODES)

    out = graph_network_forward(params, block_params, x, edge_attr,
                                senders, receivers)
    jax.block_until_ready(out)

    assert out["nodes"].shape == (N_NODES, HIDDEN)
    assert out["edges"].shape == (N_EDGES, HIDDEN)
    assert out["selection"].shape == (N_NODES, N_SEL)

    # relaxed tolerance: matmul operands + outputs are bf16 (f32 accumulation)
    ref = reference_forward(params, block_params, x, edge_attr, senders, receivers)
    err_e = float(jnp.max(jnp.abs(out["edges"].astype(jnp.float32) - ref["edges"])))
    err_n = float(jnp.max(jnp.abs(out["nodes"].astype(jnp.float32) - ref["nodes"])))
    err_s = float(jnp.max(jnp.abs(out["selection"].astype(jnp.float32) - ref["selection"])))
    assert err_e < 2e-1, err_e
    assert err_n < 1e-1, err_n
    assert err_s < 1.5e-1, err_s

    print("KERNEL_OK")
</pallas_src>

<mosaic_0001>
module attributes {stable_mosaic.version = 11 : i64} {
  func.func @_edge_agg_kernel(%arg0: i32, %arg1: i32, %arg2: memref<128x128xbf16, #tpu.memory_space<vmem>>, %arg3: memref<128x128xbf16, #tpu.memory_space<vmem>>, %arg4: memref<128x1xi32, #tpu.memory_space<vmem>>, %arg5: memref<128x1xi32, #tpu.memory_space<vmem>>, %arg6: memref<1x128xi32, #tpu.memory_space<vmem>>, %arg7: memref<128x128xbf16, #tpu.memory_space<vmem>>, %arg8: memref<1x128xf32, #tpu.memory_space<vmem>>, %arg9: memref<128x128xbf16, #tpu.memory_space<vmem>>, %arg10: memref<1x128xf32, #tpu.memory_space<vmem>>, %arg11: memref<128x128xbf16, #tpu.memory_space<vmem>>, %arg12: memref<128x128xf32, #tpu.memory_space<vmem>>, %arg13: memref<256x128xbf16, #tpu.memory_space<vmem>>) attributes {dimension_semantics = [#tpu.dimension_semantics<parallel>, #tpu.dimension_semantics<arbitrary>], iteration_bounds = array<i64: 2, 1>, scalar_prefetch = 0 : i64, scratch_operands = 1 : i64, tpu.core_type = #tpu.core_type<tc>, window_params = [{pipeline_mode = #tpu.pipeline_mode<synchronous>, transform_indices = @transform_0, window_bounds = array<i64: 128, 128>}, {transform_indices = @transform_1, window_bounds = array<i64: 128, 128>}, {transform_indices = @transform_2, window_bounds = array<i64: 128, 1>}, {transform_indices = @transform_3, window_bounds = array<i64: 128, 1>}, {transform_indices = @transform_4, window_bounds = array<i64: 1, 128>}, {pipeline_mode = #tpu.pipeline_mode<synchronous>, transform_indices = @transform_5, window_bounds = array<i64: 128, 128>}, {pipeline_mode = #tpu.pipeline_mode<synchronous>, transform_indices = @transform_6, window_bounds = array<i64: 1, 128>}, {pipeline_mode = #tpu.pipeline_mode<synchronous>, transform_indices = @transform_7, window_bounds = array<i64: 128, 128>}, {pipeline_mode = #tpu.pipeline_mode<synchronous>, transform_indices = @transform_8, window_bounds = array<i64: 1, 128>}, {transform_indices = @transform_9, window_bounds = array<i64: 128, 128>}, {transform_indices = @transform_10, window_bounds = array<i64: 128, 128>}]} {
    %c0_i32 = arith.constant 0 : i32
    %0 = arith.cmpi eq, %arg1, %c0_i32 : i32
    %1 = arith.extui %0 : i1 to i32
    %c0_i32_0 = arith.constant 0 : i32
    %2 = arith.cmpi ne, %1, %c0_i32_0 : i32
    scf.if %2 {
      %c0_20 = arith.constant 0 : index
      %c0_21 = arith.constant 0 : index
      %40 = vector.load %arg7[%c0_20, %c0_21] : memref<128x128xbf16, #tpu.memory_space<vmem>>, vector<128x128xbf16>
      %c0_22 = arith.constant 0 : index
      %c0_23 = arith.constant 0 : index
      %41 = vector.load %arg13[%c0_22, %c0_23] : memref<256x128xbf16, #tpu.memory_space<vmem>>, vector<128x128xbf16>
      tpu.vector_store %arg13[%c0_22, %c0_23], %40 {strides = array<i32>} : memref<256x128xbf16, #tpu.memory_space<vmem>>, vector<128x128xbf16>,
      %c0_24 = arith.constant 0 : index
      %c0_25 = arith.constant 0 : index
      %42 = vector.load %arg2[%c0_24, %c0_25] : memref<128x128xbf16, #tpu.memory_space<vmem>>, vector<128x128xbf16>
      %c0_26 = arith.constant 0 : index
      %c0_27 = arith.constant 0 : index
      %43 = vector.load %arg9[%c0_26, %c0_27] : memref<128x128xbf16, #tpu.memory_space<vmem>>, vector<128x128xbf16>
      %cst_28 = arith.constant dense<0.000000e+00> : vector<128x128xf32>
      %44 = tpu.matmul %42, %43, %cst_28 {dimension_numbers = #tpu.dot_dimension_numbers<[1], [0], [0], [1], [0, 0, 1, 1], [], []>} : vector<128x128xbf16>, vector<128x128xbf16>, vector<128x128xf32> -> vector<128x128xf32>
      %c0_29 = arith.constant 0 : index
      %c0_30 = arith.constant 0 : index
      %45 = vector.load %arg10[%c0_29, %c0_30] : memref<1x128xf32, #tpu.memory_space<vmem>>, vector<1x128xf32>
      %46 = vector.broadcast %45 : vector<1x128xf32> to vector<128x128xf32>
      %47 = arith.addf %44, %46 : vector<128x128xf32>
      %48 = arith.truncf %47 : vector<128x128xf32> to vector<128x128xbf16>
      %c128 = arith.constant 128 : index
      %c0_31 = arith.constant 0 : index
      %49 = vector.load %arg13[%c128, %c0_31] : memref<256x128xbf16, #tpu.memory_space<vmem>>, vector<128x128xbf16>
      tpu.vector_store %arg13[%c128, %c0_31], %48 {strides = array<i32>} : memref<256x128xbf16, #tpu.memory_space<vmem>>, vector<128x128xbf16>,
      %cst_32 = arith.constant 0.000000e+00 : f32
      %50 = vector.broadcast %cst_32 : f32 to vector<128x128xf32>
      %c0_33 = arith.constant 0 : index
      %c0_34 = arith.constant 0 : index
      %51 = vector.load %arg12[%c0_33, %c0_34] : memref<128x128xf32, #tpu.memory_space<vmem>>, vector<128x128xf32>
      tpu.vector_store %arg12[%c0_33, %c0_34], %50 {strides = array<i32>} : memref<128x128xf32, #tpu.memory_space<vmem>>, vector<128x128xf32>,
    } else {
    }
    %3 = tpu.iota {dimensions = array<i32: 1>} : vector<128x128xi32>
    %c0 = arith.constant 0 : index
    %c0_1 = arith.constant 0 : index
    %4 = vector.load %arg4[%c0, %c0_1] : memref<128x1xi32, #tpu.memory_space<vmem>>, vector<128x1xi32>
    %5 = vector.broadcast %4 : vector<128x1xi32> to vector<128x128xi32>
    %6 = arith.cmpi eq, %5, %3 : vector<128x128xi32>
    %7 = arith.extui %6 : vector<128x128xi1> to vector<128x128xi32>
    %8 = arith.sitofp %7 : vector<128x128xi32> to vector<128x128xf32>
    %9 = arith.truncf %8 : vector<128x128xf32> to vector<128x128xbf16>
    %c0_2 = arith.constant 0 : index
    %c0_3 = arith.constant 0 : index
    %10 = vector.load %arg5[%c0_2, %c0_3] : memref<128x1xi32, #tpu.memory_space<vmem>>, vector<128x1xi32>
    %11 = vector.broadcast %10 : vector<128x1xi32> to vector<128x128xi32>
    %12 = arith.cmpi eq, %11, %3 : vector<128x128xi32>
    %13 = arith.extui %12 : vector<128x128xi1> to vector<128x128xi32>
    %14 = arith.sitofp %13 : vector<128x128xi32> to vector<128x128xf32>
    %15 = arith.truncf %14 : vector<128x128xf32> to vector<128x128xbf16>
    %16 = arith.addf %9, %15 : vector<128x128xbf16>
    %c0_4 = arith.constant 0 : index
    %c0_5 = arith.constant 0 : index
    %17 = vector.load %arg3[%c0_4, %c0_5] : memref<128x128xbf16, #tpu.memory_space<vmem>>, vector<128x128xbf16>
    %18 = tpu.concatenate %17, %16 in 1 : vector<128x128xbf16>, vector<128x128xbf16> -> vector<128x256xbf16>
    %c0_6 = arith.constant 0 : index
    %c0_7 = arith.constant 0 : index
    %19 = vector.load %arg13[%c0_6, %c0_7] : memref<256x128xbf16, #tpu.memory_space<vmem>>, vector<256x128xbf16>
    %cst = arith.constant dense<0.000000e+00> : vector<128x128xf32>
    %20 = tpu.matmul %18, %19, %cst {dimension_numbers = #tpu.dot_dimension_numbers<[1], [0], [0], [1], [0, 0, 1, 1], [], []>} : vector<128x256xbf16>, vector<256x128xbf16>, vector<128x128xf32> -> vector<128x128xf32>
    %c0_8 = arith.constant 0 : index
    %c0_9 = arith.constant 0 : index
    %21 = vector.load %arg8[%c0_8, %c0_9] : memref<1x128xf32, #tpu.memory_space<vmem>>, vector<1x128xf32>
    %22 = vector.broadcast %21 : vector<1x128xf32> to vector<128x128xf32>
    %23 = arith.addf %20, %22 : vector<128x128xf32>
    %cst_10 = arith.constant 0.000000e+00 : f32
    %24 = vector.broadcast %cst_10 : f32 to vector<128x128xf32>
    %25 = arith.maximumf %23, %24 : vector<128x128xf32>
    %26 = arith.truncf %25 : vector<128x128xf32> to vector<128x128xbf16>
    %c0_11 = arith.constant 0 : index
    %c0_12 = arith.constant 0 : index
    %27 = vector.load %arg11[%c0_11, %c0_12] : memref<128x128xbf16, #tpu.memory_space<vmem>>, vector<128x128xbf16>
    tpu.vector_store %arg11[%c0_11, %c0_12], %26 {strides = array<i32>} : memref<128x128xbf16, #tpu.memory_space<vmem>>, vector<128x128xbf16>,
    %28 = tpu.iota {dimensions = array<i32: 0>} : vector<128x128xi32>
    %c0_13 = arith.constant 0 : index
    %c0_14 = arith.constant 0 : index
    %29 = vector.load %arg6[%c0_13, %c0_14] : memref<1x128xi32, #tpu.memory_space<vmem>>, vector<1x128xi32>
    %30 = vector.broadcast %29 : vector<1x128xi32> to vector<128x128xi32>
    %31 = arith.cmpi eq, %30, %28 : vector<128x128xi32>
    %32 = arith.extui %31 : vector<128x128xi1> to vector<128x128xi32>
    %33 = arith.sitofp %32 : vector<128x128xi32> to vector<128x128xf32>
    %34 = arith.truncf %33 : vector<128x128xf32> to vector<128x128xbf16>
    %c0_15 = arith.constant 0 : index
    %c0_16 = arith.constant 0 : index
    %35 = vector.load %arg12[%c0_15, %c0_16] : memref<128x128xf32, #tpu.memory_space<vmem>>, vector<128x128xf32>
    %36 = arith.truncf %25 : vector<128x128xf32> to vector<128x128xbf16>
    %cst_17 = arith.constant dense<0.000000e+00> : vector<128x128xf32>
    %37 = tpu.matmul %34, %36, %cst_17 {dimension_numbers = #tpu.dot_dimension_numbers<[1], [0], [0], [1], [0, 0, 1, 1], [], []>} : vector<128x128xbf16>, vector<128x128xbf16>, vector<128x128xf32> -> vector<128x128xf32>
    %38 = arith.addf %35, %37 : vector<128x128xf32>
    %c0_18 = arith.constant 0 : index
    %c0_19 = arith.constant 0 : index
    %39 = vector.load %arg12[%c0_18, %c0_19] : memref<128x128xf32, #tpu.memory_space<vmem>>, vector<128x128xf32>
    tpu.vector_store %arg12[%c0_18, %c0_19], %38 {strides = array<i32>} : memref<128x128xf32, #tpu.memory_space<vmem>>, vector<128x128xf32>,
    return
  }
  func.func @transform_0(%arg0: i32, %arg1: i32) -> (i32, i32) {
    %c0_i32 = arith.constant 0 : i32
    %c0_i32_0 = arith.constant 0 : i32
    %c0_i32_1 = arith.constant 0 : i32
    return %c0_i32, %c0_i32_0 : i32, i32
  }
  func.func @transform_1(%arg0: i32, %arg1: i32) -> (i32, i32) {
    %c1_i32 = arith.constant 1 : i32
    %0 = arith.muli %arg0, %c1_i32 : i32
    %1 = arith.addi %0, %arg1 : i32
    %c0_i32 = arith.constant 0 : i32
    %c0_i32_0 = arith.constant 0 : i32
    return %1, %c0_i32 : i32, i32
  }
  func.func @transform_2(%arg0: i32, %arg1: i32) -> (i32, i32) {
    %c1_i32 = arith.constant 1 : i32
    %0 = arith.muli %arg0, %c1_i32 : i32
    %1 = arith.addi %0, %arg1 : i32
    %c0_i32 = arith.constant 0 : i32
    %c0_i32_0 = arith.constant 0 : i32
    return %1, %c0_i32 : i32, i32
  }
  func.func @transform_3(%arg0: i32, %arg1: i32) -> (i32, i32) {
    %c1_i32 = arith.constant 1 : i32
    %0 = arith.muli %arg0, %c1_i32 : i32
    %1 = arith.addi %0, %arg1 : i32
    %c0_i32 = arith.constant 0 : i32
    %c0_i32_0 = arith.constant 0 : i32
    return %1, %c0_i32 : i32, i32
  }
  func.func @transform_4(%arg0: i32, %arg1: i32) -> (i32, i32) {
    %c1_i32 = arith.constant 1 : i32
    %0 = arith.muli %arg0, %c1_i32 : i32
    %1 = arith.addi %0, %arg1 : i32
    %c0_i32 = arith.constant 0 : i32
    %c0_i32_0 = arith.constant 0 : i32
    return %c0_i32, %1 : i32, i32
  }
  func.func @transform_5(%arg0: i32, %arg1: i32) -> (i32, i32) {
    %c0_i32 = arith.constant 0 : i32
    %c0_i32_0 = arith.constant 0 : i32
    %c0_i32_1 = arith.constant 0 : i32
    return %c0_i32, %c0_i32_0 : i32, i32
  }
  func.func @transform_6(%arg0: i32, %arg1: i32) -> (i32, i32) {
    %c0_i32 = arith.constant 0 : i32
    %c0_i32_0 = arith.constant 0 : i32
    %c0_i32_1 = arith.constant 0 : i32
    return %c0_i32, %c0_i32_0 : i32, i32
  }
  func.func @transform_7(%arg0: i32, %arg1: i32) -> (i32, i32) {
    %c0_i32 = arith.constant 0 : i32
    %c0_i32_0 = arith.constant 0 : i32
    %c0_i32_1 = arith.constant 0 : i32
    return %c0_i32, %c0_i32_0 : i32, i32
  }
  func.func @transform_8(%arg0: i32, %arg1: i32) -> (i32, i32) {
    %c0_i32 = arith.constant 0 : i32
    %c0_i32_0 = arith.constant 0 : i32
    %c0_i32_1 = arith.constant 0 : i32
    return %c0_i32, %c0_i32_0 : i32, i32
  }
  func.func @transform_9(%arg0: i32, %arg1: i32) -> (i32, i32) {
    %c1_i32 = arith.constant 1 : i32
    %0 = arith.muli %arg0, %c1_i32 : i32
    %1 = arith.addi %0, %arg1 : i32
    %c0_i32 = arith.constant 0 : i32
    %c0_i32_0 = arith.constant 0 : i32
    return %1, %c0_i32 : i32, i32
  }
  func.func @transform_10(%arg0: i32, %arg1: i32) -> (i32, i32) {
    %c0_i32 = arith.constant 0 : i32
    %c0_i32_0 = arith.constant 0 : i32
    return %arg0, %c0_i32 : i32, i32
  }
}

</mosaic_0001>

<llo_original>
// kernel: tpu_custom_call.1
$region0: #{tpu_custom_call.1}
  #allocation0 [shape = 'u32[]', space=smem, size = 0x4, offset = 0x4, fixed_abs, tag = 'smem constant byte address 0x4 - core index']
  #allocation1 [shape = 'u32[144,128]{1,0:T(1,128)}', space=vmem, size = 0x12000, scoped, tag = 'internal scratch']
  #allocation2 [shape = 'bf16[256,128]{1,0:T(16,128)(2,1)}', space=vmem, size = 0x10000, scoped, tag = 'scratch operand']
  %s0 = inlined_call_operand.hbm [shape: bf16[128,128], index: 0, kind: input, shape index: {}]
  %s1 = inlined_call_operand.hbm [shape: bf16[256,128], index: 1, kind: input, shape index: {}]
  %s2 = inlined_call_operand.hbm [shape: s32[256,1], index: 2, kind: input, shape index: {}]
  %s3 = inlined_call_operand.hbm [shape: s32[256,1], index: 3, kind: input, shape index: {}]
  %s4 = inlined_call_operand.hbm [shape: s32[1,256], index: 4, kind: input, shape index: {}]
  %s5 = inlined_call_operand.hbm [shape: bf16[128,128], index: 5, kind: input, shape index: {}]
  %s6 = inlined_call_operand.hbm [shape: f32[1,128], index: 6, kind: input, shape index: {}]
  %s7 = inlined_call_operand.hbm [shape: bf16[128,128], index: 7, kind: input, shape index: {}]
  %s8 = inlined_call_operand.hbm [shape: f32[1,128], index: 8, kind: input, shape index: {}]
  %s9 = inlined_call_operand.hbm [shape: bf16[256,128], index: 9, kind: output, shape index: {0}]
  %s10 = inlined_call_operand.hbm [shape: f32[256,128], index: 10, kind: output, shape index: {1}]
  %11 = xla_tuple %s9, %s10
  %s12 = sld [smem:[#allocation0]]
  $region117: #{tpu_custom_call.1} parent=0
    _
  %s14 = ssub.s32 1, %s12
  %s15 = scalar_select 0, %s14, %s12
  $region1: #{tpu_custom_call.1} parent=0
    #allocation3 [shape = 'u8[32768]{0}', space=vmem, size = 0x8000, scoped, tag = 'input window, operand 0, single buffered']
    #allocation4 [shape = 's32[2]{0}', space=sflag, size = 0x8, scoped, tag = 'scoped memory for tpu_custom_call.1']
    #allocation5 [shape = 's32[2]{0}', space=sflag, size = 0x8, scoped, tag = 'scoped memory for tpu_custom_call.1']
    #allocation6 [shape = 'u8[65536]{0}', space=vmem, size = 0x10000, scoped, tag = 'input window, operand 1']
    #allocation7 [shape = 's32[2]{0}', space=sflag, size = 0x8, scoped, tag = 'scoped memory for tpu_custom_call.1']
    #allocation8 [shape = 'u8[131072]{0}', space=vmem, size = 0x20000, scoped, tag = 'input window, operand 2']
    #allocation9 [shape = 'u8[131072]{0}', space=vmem, size = 0x20000, scoped, tag = 'input window, operand 3']
    #allocation10 [shape = 's32[2]{0}', space=sflag, size = 0x8, scoped, tag = 'scoped memory for tpu_custom_call.1']
    #allocation11 [shape = 'u8[1024]{0}', space=vmem, size = 0x400, scoped, tag = 'input window, operand 4']
    #allocation12 [shape = 'u8[32768]{0}', space=vmem, size = 0x8000, scoped, tag = 'input window, operand 5, single buffered']
    #allocation13 [shape = 's32[1]{0}', space=sflag, size = 0x4, scoped, tag = 'scoped memory for tpu_custom_call.1']
    #allocation14 [shape = 'u8[512]{0}', space=vmem, size = 0x400, scoped, tag = 'input window, operand 6, single buffered']
    #allocation15 [shape = 'u8[32768]{0}', space=vmem, size = 0x8000, scoped, tag = 'input window, operand 7, single buffered']
    #allocation16 [shape = 's32[1]{0}', space=sflag, size = 0x4, scoped, tag = 'scoped memory for tpu_custom_call.1']
    #allocation17 [shape = 'u8[512]{0}', space=vmem, size = 0x400, scoped, tag = 'input window, operand 8, single buffered']
    #allocation18 [shape = 'u8[65536]{0}', space=vmem, size = 0x10000, scoped, tag = 'output window, operand 0']
    #allocation19 [shape = 'u8[131072]{0}', space=vmem, size = 0x20000, scoped, tag = 'output window, operand 1']
    #allocation20 [shape = 's32[2]{0}', space=sflag, size = 0x8, scoped, tag = 'scoped memory for tpu_custom_call.1']
    %16 = vsyncpa [#allocation4], 0
    %17 = vsyncpa [#allocation7], 0
    %s18 = scalar_lea.sflag [#allocation7], 1
    %19 = vsyncpa %s18, 0
    %20 = vsyncpa [#allocation10], 0
    %s21 = scalar_lea.sflag [#allocation10], 1
    %22 = vsyncpa %s21, 0
    %23 = vsyncpa [#allocation13], 0
    %24 = vsyncpa [#allocation16], 0
    %25 = vsyncpa [#allocation5], 0
    %s26 = scalar_lea.sflag [#allocation5], 1
    %27 = vsyncpa %s26, 0
    %28 = vsyncpa [#allocation20], 0
    %s29 = scalar_lea.sflag [#allocation20], 1
    %30 = vsyncpa %s29, 0
    loop: start=0, step=1, limit=4
    $region2: #{tpu_custom_call.1} parent=1 // loop_pre_header
      _
    $region3: #{tpu_custom_call.1} parent=1 // loop_header
      %s32 = sphi 0, %s36
      %p33 = scmp.ge.s32.totalorder %s32, 4
      %s39 = sphi 0, %s51
      %s40 = sphi 0, %s47
      %s41 = sphi 0, %s39
      %s42 = sphi 0, %s40
      %s43 = sphi 0, %s41
      %s44 = sphi 0, %s42
      %s52 = sphi 0, %s52
      %s54 = sphi 0, %s52
      %s55 = sphi 0, %s54
      %s69 = sphi 0, %s55
      %s77 = sphi 0, %s79
      %s80 = sphi 0, %s77
      %s81 = sphi 0, %s80
      %s97 = sphi 0, %s81
      %s105 = sphi 0, %s107
      %s108 = sphi 0, %s105
      %s109 = sphi 0, %s108
      %s125 = sphi 0, %s109
      %s133 = sphi 0, %s135
      %s136 = sphi 0, %s133
      %s137 = sphi 0, %s136
      %s153 = sphi 0, %s137
      %s161 = sphi 0, %s163
      %s164 = sphi 0, %s161
      %s165 = sphi 0, %s164
      %s181 = sphi 0, %s165
      %s185 = sphi 0, %s185
      %s187 = sphi 0, %s185
      %s188 = sphi 0, %s187
      %s202 = sphi 0, %s188
      %s206 = sphi 0, %s206
      %s208 = sphi 0, %s206
      %s209 = sphi 0, %s208
      %s223 = sphi 0, %s209
      %s227 = sphi 0, %s227
      %s229 = sphi 0, %s227
      %s230 = sphi 0, %s229
      %s244 = sphi 0, %s230
      %s248 = sphi 0, %s248
      %s250 = sphi 0, %s248
      %s251 = sphi 0, %s250
      %s265 = sphi 0, %s251
      %s273 = sphi 0, %s275
      %s276 = sphi 0, %s273
      %s277 = sphi 0, %s276
      %s293 = sphi 0, %s277
      %s299 = sphi 0, %s301
      %s302 = sphi 0, %s299
      %s303 = sphi 0, %s302
      %s319 = sphi 0, %s303
    $region4: #{tpu_custom_call.1} parent=1 // loop_header_branch
      %35 = sbr.rel (%p33) target = $region8
    $region5: #{tpu_custom_call.1} parent=1 // loop_body
      %s37 = ssub.s32 %s32, 1
      %s38 = ssub.s32 %s32, 2
      %s45 = sadd.s32 1, %s40
      %p46 = scmp.ge.s32.totalorder %s45, 1
      %s47 = scalar_select %p46, 0, %s45
      %s48 = sadd.s32 1, %s39
      %s49 = scalar_select %p46, %s48, %s39
      %p50 = scmp.ge.s32.totalorder %s49, 2
      %s51 = scalar_select %p50, 0, %s49
      %s53 = sadd.s32 %s52, 1
      %p56 = scmp.eq.s32.totalorder %s32, 1
      %p57 = scmp.ne.s32.totalorder %s52, %s54
      %p58 = scmp.eq.s32.totalorder %s32, 0
      %p59 = por %p57, %p58
      %p60 = scmp.ne.s32.totalorder %s52, %s54
      %p61 = scmp.eq.s32.totalorder %s37, 1
      %p62 = por %p60, %p61
      %p63 = scmp.ne.s32.totalorder %s54, %s55
      %p64 = scmp.eq.s32.totalorder %s37, 0
      %p65 = por %p63, %p64
      %p66 = scmp.ne.s32.totalorder %s54, %s55
      %p67 = scmp.eq.s32.totalorder %s38, 1
      %p68 = por %p66, %p67
      %p70 = scmp.ne.s32.totalorder %s55, %s69
      %p71 = scmp.eq.s32.totalorder %s38, 0
      %p72 = por %p70, %p71
      %s73 = sadd.s32 %s39, %s40
      %s74 = sadd.s32 %s51, %s47
      %s75 = ssub.s32 %s73, %s74
      %p76 = scmp.eq.s32.totalorder %s75, 0
      %s78 = sadd.s32 %s77, 1
      %s79 = scalar_select %p76, %s77, %s78
      %p82 = pneg %p76
      %p83 = scmp.eq.s32.totalorder %s32, 1
      %p84 = por %p82, %p83
      %p85 = scmp.ne.s32.totalorder %s77, %s80
      %p86 = scmp.eq.s32.totalorder %s32, 0
      %p87 = por %p85, %p86
      %p88 = scmp.ne.s32.totalorder %s77, %s80
      %p89 = scmp.eq.s32.totalorder %s37, 1
      %p90 = por %p88, %p89
      %p91 = scmp.ne.s32.totalorder %s80, %s81
      %p92 = scmp.eq.s32.totalorder %s37, 0
      %p93 = por %p91, %p92
      %p94 = scmp.ne.s32.totalorder %s80, %s81
      %p95 = scmp.eq.s32.totalorder %s38, 1
      %p96 = por %p94, %p95
      %p98 = scmp.ne.s32.totalorder %s81, %s97
      %p99 = scmp.eq.s32.totalorder %s38, 0
      %p100 = por %p98, %p99
      %s101 = sadd.s32 %s39, %s40
      %s102 = sadd.s32 %s51, %s47
      %s103 = ssub.s32 %s101, %s102
      %p104 = scmp.eq.s32.totalorder %s103, 0
      %s106 = sadd.s32 %s105, 1
      %s107 = scalar_select %p104, %s105, %s106
      %p110 = pneg %p104
      %p111 = scmp.eq.s32.totalorder %s32, 1
      %p112 = por %p110, %p111
      %p113 = scmp.ne.s32.totalorder %s105, %s108
      %p114 = scmp.eq.s32.totalorder %s32, 0
      %p115 = por %p113, %p114
      %p116 = scmp.ne.s32.totalorder %s105, %s108
      %p117 = scmp.eq.s32.totalorder %s37, 1
      %p118 = por %p116, %p117
      %p119 = scmp.ne.s32.totalorder %s108, %s109
      %p120 = scmp.eq.s32.totalorder %s37, 0
      %p121 = por %p119, %p120
      %p122 = scmp.ne.s32.totalorder %s108, %s109
      %p123 = scmp.eq.s32.totalorder %s38, 1
      %p124 = por %p122, %p123
      %p126 = scmp.ne.s32.totalorder %s109, %s125
      %p127 = scmp.eq.s32.totalorder %s38, 0
      %p128 = por %p126, %p127
      %s129 = sadd.s32 %s39, %s40
      %s130 = sadd.s32 %s51, %s47
      %s131 = ssub.s32 %s129, %s130
      %p132 = scmp.eq.s32.totalorder %s131, 0
      %s134 = sadd.s32 %s133, 1
      %s135 = scalar_select %p132, %s133, %s134
      %p138 = pneg %p132
      %p139 = scmp.eq.s32.totalorder %s32, 1
      %p140 = por %p138, %p139
      %p141 = scmp.ne.s32.totalorder %s133, %s136
      %p142 = scmp.eq.s32.totalorder %s32, 0
      %p143 = por %p141, %p142
      %p144 = scmp.ne.s32.totalorder %s133, %s136
      %p145 = scmp.eq.s32.totalorder %s37, 1
      %p146 = por %p144, %p145
      %p147 = scmp.ne.s32.totalorder %s136, %s137
      %p148 = scmp.eq.s32.totalorder %s37, 0
      %p149 = por %p147, %p148
      %p150 = scmp.ne.s32.totalorder %s136, %s137
      %p151 = scmp.eq.s32.totalorder %s38, 1
      %p152 = por %p150, %p151
      %p154 = scmp.ne.s32.totalorder %s137, %s153
      %p155 = scmp.eq.s32.totalorder %s38, 0
      %p156 = por %p154, %p155
      %s157 = sadd.s32 %s39, %s40
      %s158 = sadd.s32 %s51, %s47
      %s159 = ssub.s32 %s157, %s158
      %p160 = scmp.eq.s32.totalorder %s159, 0
      %s162 = sadd.s32 %s161, 1
      %s163 = scalar_select %p160, %s161, %s162
      %p166 = pneg %p160
      %p167 = scmp.eq.s32.totalorder %s32, 1
      %p168 = por %p166, %p167
      %p169 = scmp.ne.s32.totalorder %s161, %s164
      %p170 = scmp.eq.s32.totalorder %s32, 0
      %p171 = por %p169, %p170
      %p172 = scmp.ne.s32.totalorder %s161, %s164
      %p173 = scmp.eq.s32.totalorder %s37, 1
      %p174 = por %p172, %p173
      %p175 = scmp.ne.s32.totalorder %s164, %s165
      %p176 = scmp.eq.s32.totalorder %s37, 0
      %p177 = por %p175, %p176
      %p178 = scmp.ne.s32.totalorder %s164, %s165
      %p179 = scmp.eq.s32.totalorder %s38, 1
      %p180 = por %p178, %p179
      %p182 = scmp.ne.s32.totalorder %s165, %s181
      %p183 = scmp.eq.s32.totalorder %s38, 0
      %p184 = por %p182, %p183
      %s186 = sadd.s32 %s185, 1
      %p189 = scmp.eq.s32.totalorder %s32, 1
      %p190 = scmp.ne.s32.totalorder %s185, %s187
      %p191 = scmp.eq.s32.totalorder %s32, 0
      %p192 = por %p190, %p191
      %p193 = scmp.ne.s32.totalorder %s185, %s187
      %p194 = scmp.eq.s32.totalorder %s37, 1
      %p195 = por %p193, %p194
      %p196 = scmp.ne.s32.totalorder %s187, %s188
      %p197 = scmp.eq.s32.totalorder %s37, 0
      %p198 = por %p196, %p197
      %p199 = scmp.ne.s32.totalorder %s187, %s188
      %p200 = scmp.eq.s32.totalorder %s38, 1
      %p201 = por %p199, %p200
      %p203 = scmp.ne.s32.totalorder %s188, %s202
      %p204 = scmp.eq.s32.totalorder %s38, 0
      %p205 = por %p203, %p204
      %s207 = sadd.s32 %s206, 1
      %p210 = scmp.eq.s32.totalorder %s32, 1
      %p211 = scmp.ne.s32.totalorder %s206, %s208
      %p212 = scmp.eq.s32.totalorder %s32, 0
      %p213 = por %p211, %p212
      %p214 = scmp.ne.s32.totalorder %s206, %s208
      %p215 = scmp.eq.s32.totalorder %s37, 1
      %p216 = por %p214, %p215
      %p217 = scmp.ne.s32.totalorder %s208, %s209
      %p218 = scmp.eq.s32.totalorder %s37, 0
      %p219 = por %p217, %p218
      %p220 = scmp.ne.s32.totalorder %s208, %s209
      %p221 = scmp.eq.s32.totalorder %s38, 1
      %p222 = por %p220, %p221
      %p224 = scmp.ne.s32.totalorder %s209, %s223
      %p225 = scmp.eq.s32.totalorder %s38, 0
      %p226 = por %p224, %p225
      %s228 = sadd.s32 %s227, 1
      %p231 = scmp.eq.s32.totalorder %s32, 1
      %p232 = scmp.ne.s32.totalorder %s227, %s229
      %p233 = scmp.eq.s32.totalorder %s32, 0
      %p234 = por %p232, %p233
      %p235 = scmp.ne.s32.totalorder %s227, %s229
      %p236 = scmp.eq.s32.totalorder %s37, 1
      %p237 = por %p235, %p236
      %p238 = scmp.ne.s32.totalorder %s229, %s230
      %p239 = scmp.eq.s32.totalorder %s37, 0
      %p240 = por %p238, %p239
      %p241 = scmp.ne.s32.totalorder %s229, %s230
      %p242 = scmp.eq.s32.totalorder %s38, 1
      %p243 = por %p241, %p242
      %p245 = scmp.ne.s32.totalorder %s230, %s244
      %p246 = scmp.eq.s32.totalorder %s38, 0
      %p247 = por %p245, %p246
      %s249 = sadd.s32 %s248, 1
      %p252 = scmp.eq.s32.totalorder %s32, 1
      %p253 = scmp.ne.s32.totalorder %s248, %s250
      %p254 = scmp.eq.s32.totalorder %s32, 0
      %p255 = por %p253, %p254
      %p256 = scmp.ne.s32.totalorder %s248, %s250
      %p257 = scmp.eq.s32.totalorder %s37, 1
      %p258 = por %p256, %p257
      %p259 = scmp.ne.s32.totalorder %s250, %s251
      %p260 = scmp.eq.s32.totalorder %s37, 0
      %p261 = por %p259, %p260
      %p262 = scmp.ne.s32.totalorder %s250, %s251
      %p263 = scmp.eq.s32.totalorder %s38, 1
      %p264 = por %p262, %p263
      %p266 = scmp.ne.s32.totalorder %s251, %s265
      %p267 = scmp.eq.s32.totalorder %s38, 0
      %p268 = por %p266, %p267
      %s269 = sadd.s32 %s39, %s40
      %s270 = sadd.s32 %s51, %s47
      %s271 = ssub.s32 %s269, %s270
      %p272 = scmp.eq.s32.totalorder %s271, 0
      %s274 = sadd.s32 %s273, 1
      %s275 = scalar_select %p272, %s273, %s274
      %p278 = pneg %p272
      %p279 = scmp.eq.s32.totalorder %s32, 1
      %p280 = por %p278, %p279
      %p281 = scmp.ne.s32.totalorder %s273, %s276
      %p282 = scmp.eq.s32.totalorder %s32, 0
      %p283 = por %p281, %p282
      %p284 = scmp.ne.s32.totalorder %s273, %s276
      %p285 = scmp.eq.s32.totalorder %s37, 1
      %p286 = por %p284, %p285
      %p287 = scmp.ne.s32.totalorder %s276, %s277
      %p288 = scmp.eq.s32.totalorder %s37, 0
      %p289 = por %p287, %p288
      %p290 = scmp.ne.s32.totalorder %s276, %s277
      %p291 = scmp.eq.s32.totalorder %s38, 1
      %p292 = por %p290, %p291
      %p294 = scmp.ne.s32.totalorder %s277, %s293
      %p295 = scmp.eq.s32.totalorder %s38, 0
      %p296 = por %p294, %p295
      %s297 = ssub.s32 %s39, %s51
      %p298 = scmp.eq.s32.totalorder %s297, 0
      %s300 = sadd.s32 %s299, 1
      %s301 = scalar_select %p298, %s299, %s300
      %p304 = pneg %p298
      %p305 = scmp.eq.s32.totalorder %s32, 1
      %p306 = por %p304, %p305
      %p307 = scmp.ne.s32.totalorder %s299, %s302
      %p308 = scmp.eq.s32.totalorder %s32, 0
      %p309 = por %p307, %p308
      %p310 = scmp.ne.s32.totalorder %s299, %s302
      %p311 = scmp.eq.s32.totalorder %s37, 1
      %p312 = por %p310, %p311
      %p313 = scmp.ne.s32.totalorder %s302, %s303
      %p314 = scmp.eq.s32.totalorder %s37, 0
      %p315 = por %p313, %p314
      %p316 = scmp.ne.s32.totalorder %s302, %s303
      %p317 = scmp.eq.s32.totalorder %s38, 1
      %p318 = por %p316, %p317
      %p320 = scmp.ne.s32.totalorder %s303, %s319
      %p321 = scmp.eq.s32.totalorder %s38, 0
      %p322 = por %p320, %p321
      %p323 = scmp.le.s32.totalorder 1, %s32
      %p324 = scmp.lt.s32.totalorder %s32, 3
      %p325 = pnand %p323, %p324
      %p326 = pneg %p325
      // Predicated region
      $region9: #{tpu_custom_call.1} parent=5 // pred_check
        _
      $region10: #{tpu_custom_call.1} parent=5 // pred_check_branch
        %328 = sbr.rel (%p325) target = $region12
      $region11: #{tpu_custom_call.1} parent=5 // pred_region
        %s329 = ssub.s32 %s32, 1
        // Predicated region
        $region13: #{tpu_custom_call.1} parent=11 // pred_check
          %p330 = pneg %p65
        $region14: #{tpu_custom_call.1} parent=11 // pred_check_branch
          %332 = sbr.rel (%p330) target = $region16
        $region15: #{tpu_custom_call.1} parent=11 // pred_region
          %s334 = ssub.s32 1024, 1024
          %335 = vsyncadd [#allocation4], %s334
          %s336 = sshll.u32 [#allocation3], 4
          %s337 = int_to_ptr.vmem [resolvable:$true] %s336
          %342 = dma.hbm_to_vmem [thread:$0]  %s0, 1024, %s337, [#allocation4], 64, 64, 4
        $region16: #{tpu_custom_call.1} parent=11 // pred_fallthru
          _
        // Predicated region
        $region17: #{tpu_custom_call.1} parent=11 // pred_check
          %p343 = pneg %p198
        $region18: #{tpu_custom_call.1} parent=11 // pred_check_branch
          %345 = sbr.rel (%p343) target = $region20
        $region19: #{tpu_custom_call.1} parent=11 // pred_region
          %s347 = ssub.s32 1024, 1024
          %348 = vsyncadd [#allocation13], %s347
          %s349 = sshll.u32 [#allocation12], 4
          %s350 = int_to_ptr.vmem [resolvable:$true] %s349
          %355 = dma.hbm_to_vmem [thread:$0]  %s5, 1024, %s350, [#allocation13], 64, 64, 4
        $region20: #{tpu_custom_call.1} parent=11 // pred_fallthru
          _
        // Predicated region
        $region21: #{tpu_custom_call.1} parent=11 // pred_check
          %p356 = pneg %p219
        $region22: #{tpu_custom_call.1} parent=11 // pred_check_branch
          %358 = sbr.rel (%p356) target = $region24
        $region23: #{tpu_custom_call.1} parent=11 // pred_region
          %s360 = ssub.s32 16, 16
          %361 = vsyncadd [#allocation13], %s360
          %s363 = sshll.u32 [#allocation14], 4
          %s364 = int_to_ptr.vmem [resolvable:$true] %s363
          %366 = dma.hbm_to_vmem [thread:$0]  %s6, 16, %s364, [#allocation13]
        $region24: #{tpu_custom_call.1} parent=11 // pred_fallthru
          _
        // Predicated region
        $region25: #{tpu_custom_call.1} parent=11 // pred_check
          %p367 = pneg %p240
        $region26: #{tpu_custom_call.1} parent=11 // pred_check_branch
          %369 = sbr.rel (%p367) target = $region28
        $region27: #{tpu_custom_call.1} parent=11 // pred_region
          %s371 = ssub.s32 1024, 1024
          %372 = vsyncadd [#allocation16], %s371
          %s373 = sshll.u32 [#allocation15], 4
          %s374 = int_to_ptr.vmem [resolvable:$true] %s373
          %379 = dma.hbm_to_vmem [thread:$0]  %s7, 1024, %s374, [#allocation16], 64, 64, 4
        $region28: #{tpu_custom_call.1} parent=11 // pred_fallthru
          _
        // Predicated region
        $region29: #{tpu_custom_call.1} parent=11 // pred_check
          %p380 = pneg %p261
        $region30: #{tpu_custom_call.1} parent=11 // pred_check_branch
          %382 = sbr.rel (%p380) target = $region32
        $region31: #{tpu_custom_call.1} parent=11 // pred_region
          %s384 = ssub.s32 16, 16
          %385 = vsyncadd [#allocation16], %s384
          %s387 = sshll.u32 [#allocation17], 4
          %s388 = int_to_ptr.vmem [resolvable:$true] %s387
          %390 = dma.hbm_to_vmem [thread:$0]  %s8, 16, %s388, [#allocation16]
        $region32: #{tpu_custom_call.1} parent=11 // pred_fallthru
          _
      $region12: #{tpu_custom_call.1} parent=5 // pred_fallthru
        _
      %p391 = scmp.lt.s32.totalorder %s32, 2
      // Predicated region
      $region33: #{tpu_custom_call.1} parent=5 // pred_check
        %p392 = pneg %p391
      $region34: #{tpu_custom_call.1} parent=5 // pred_check_branch
        %394 = sbr.rel (%p392) target = $region36
      $region35: #{tpu_custom_call.1} parent=5 // pred_region
        // Predicated region
        $region37: #{tpu_custom_call.1} parent=35 // pred_check
          %p395 = pneg %p87
        $region38: #{tpu_custom_call.1} parent=35 // pred_check_branch
          %397 = sbr.rel (%p395) target = $region40
        $region39: #{tpu_custom_call.1} parent=35 // pred_region
          %s398 = sand.u32 %s32, 1
          %s399 = scalar_lea.sflag [#allocation7], %s398
          %s400 = sand.u32 %s77, 1
          %s401 = smul.addr %s400, 64
          %s402 = scalar_lea.vmem [#allocation6], %s401
          %s403 = sadd.s32 %s39, %s40
          %s404 = smul.u32 16, %s403
          %s406 = ssub.s32 1024, 1024
          %407 = vsyncadd %s399, %s406
          %s408 = smul.addr %s404, 64
          %s409 = scalar_lea.hbm %s1, %s408
          %s410 = sshll.u32 %s402, 4
          %s411 = int_to_ptr.vmem [resolvable:$true] %s410
          %416 = dma.hbm_to_vmem [thread:$0]  %s409, 1024, %s411, %s399, 64, 64, 4
        $region40: #{tpu_custom_call.1} parent=35 // pred_fallthru
          _
        // Predicated region
        $region41: #{tpu_custom_call.1} parent=35 // pred_check
          %p417 = pneg %p115
        $region42: #{tpu_custom_call.1} parent=35 // pred_check_branch
          %419 = sbr.rel (%p417) target = $region44
        $region43: #{tpu_custom_call.1} parent=35 // pred_region
          %s420 = sand.u32 %s32, 1
          %s421 = scalar_lea.sflag [#allocation7], %s420
          %s422 = sand.u32 %s105, 1
          %s423 = smul.addr %s422, 128
          %s424 = scalar_lea.vmem [#allocation8], %s423
          %s425 = sadd.s32 %s39, %s40
          %s426 = smul.u32 16, %s425
          %s428 = ssub.s32 2048, 2048
          %429 = vsyncadd %s421, %s428
          %s430 = smul.addr %s426, 128
          %s431 = scalar_lea.hbm %s2, %s430
          %s432 = sshll.u32 %s424, 4
          %s433 = int_to_ptr.vmem [resolvable:$true] %s432
          %438 = dma.hbm_to_vmem [thread:$0]  %s431, 2048, %s433, %s421, 128, 128, 8
        $region44: #{tpu_custom_call.1} parent=35 // pred_fallthru
          _
        // Predicated region
        $region45: #{tpu_custom_call.1} parent=35 // pred_check
          %p439 = pneg %p143
        $region46: #{tpu_custom_call.1} parent=35 // pred_check_branch
          %441 = sbr.rel (%p439) target = $region48
        $region47: #{tpu_custom_call.1} parent=35 // pred_region
          %s442 = sand.u32 %s32, 1
          %s443 = scalar_lea.sflag [#allocation10], %s442
          %s444 = sand.u32 %s133, 1
          %s445 = smul.addr %s444, 128
          %s446 = scalar_lea.vmem [#allocation9], %s445
          %s447 = sadd.s32 %s39, %s40
          %s448 = smul.u32 16, %s447
          %s450 = ssub.s32 2048, 2048
          %451 = vsyncadd %s443, %s450
          %s452 = smul.addr %s448, 128
          %s453 = scalar_lea.hbm %s3, %s452
          %s454 = sshll.u32 %s446, 4
          %s455 = int_to_ptr.vmem [resolvable:$true] %s454
          %460 = dma.hbm_to_vmem [thread:$0]  %s453, 2048, %s455, %s443, 128, 128, 8
        $region48: #{tpu_custom_call.1} parent=35 // pred_fallthru
          _
        // Predicated region
        $region49: #{tpu_custom_call.1} parent=35 // pred_check
          %p461 = pneg %p171
        $region50: #{tpu_custom_call.1} parent=35 // pred_check_branch
          %463 = sbr.rel (%p461) target = $region52
        $region51: #{tpu_custom_call.1} parent=35 // pred_region
          %s464 = sand.u32 %s32, 1
          %s465 = scalar_lea.sflag [#allocation10], %s464
          %s466 = sand.u32 %s161, 1
          %s467 = scalar_lea.vmem [#allocation11], %s466
          %s468 = sadd.s32 %s39, %s40
          %s470 = ssub.s32 16, 16
          %471 = vsyncadd %s465, %s470
          %s472 = smul.addr %s468, 16
          %s473 = scalar_lea.hbm %s4, %s472
          %s475 = sshll.u32 %s467, 4
          %s476 = int_to_ptr.vmem [resolvable:$true] %s475
          %478 = dma.hbm_to_vmem [thread:$0]  %s473, 16, %s476, %s465
        $region52: #{tpu_custom_call.1} parent=35 // pred_fallthru
          _
      $region36: #{tpu_custom_call.1} parent=5 // pred_fallthru
        _
      %p479 = scmp.le.s32.totalorder 1, %s32
      %p480 = scmp.lt.s32.totalorder %s32, 3
      %p481 = pnand %p479, %p480
      %p482 = pneg %p481
      // Predicated region
      $region53: #{tpu_custom_call.1} parent=5 // pred_check
        _
      $region54: #{tpu_custom_call.1} parent=5 // pred_check_branch
        %484 = sbr.rel (%p481) target = $region56
      $region55: #{tpu_custom_call.1} parent=5 // pred_region
        %s485 = ssub.s32 %s32, 1
        // Predicated region
        $region57: #{tpu_custom_call.1} parent=55 // pred_check
          %p486 = pneg %p65
        $region58: #{tpu_custom_call.1} parent=55 // pred_check_branch
          %488 = sbr.rel (%p486) target = $region60
        $region59: #{tpu_custom_call.1} parent=55 // pred_region
          %489 = dma.done [#allocation4], 1024
        $region60: #{tpu_custom_call.1} parent=55 // pred_fallthru
          _
        %s490 = sand.u32 %s37, 1
        %s491 = scalar_lea.sflag [#allocation7], %s490
        %s492 = sand.u32 %s80, 1
        %s493 = smul.addr %s492, 64
        %s494 = scalar_lea.vmem [#allocation6], %s493
        // Predicated region
        $region61: #{tpu_custom_call.1} parent=55 // pred_check
          %p495 = pneg %p93
        $region62: #{tpu_custom_call.1} parent=55 // pred_check_branch
          %497 = sbr.rel (%p495) target = $region64
        $region63: #{tpu_custom_call.1} parent=55 // pred_region
          %498 = dma.done %s491, 1024
        $region64: #{tpu_custom_call.1} parent=55 // pred_fallthru
          _
        %s499 = sand.u32 %s37, 1
        %s500 = scalar_lea.sflag [#allocation7], %s499
        %s501 = sand.u32 %s108, 1
        %s502 = smul.addr %s501, 128
        %s503 = scalar_lea.vmem [#allocation8], %s502
        // Predicated region
        $region65: #{tpu_custom_call.1} parent=55 // pred_check
          %p504 = pneg %p121
        $region66: #{tpu_custom_call.1} parent=55 // pred_check_branch
          %506 = sbr.rel (%p504) target = $region68
        $region67: #{tpu_custom_call.1} parent=55 // pred_region
          %507 = dma.done %s500, 2048
        $region68: #{tpu_custom_call.1} parent=55 // pred_fallthru
          _
        %s508 = sand.u32 %s37, 1
        %s509 = scalar_lea.sflag [#allocation10], %s508
        %s510 = sand.u32 %s136, 1
        %s511 = smul.addr %s510, 128
        %s512 = scalar_lea.vmem [#allocation9], %s511
        // Predicated region
        $region69: #{tpu_custom_call.1} parent=55 // pred_check
          %p513 = pneg %p149
        $region70: #{tpu_custom_call.1} parent=55 // pred_check_branch
          %515 = sbr.rel (%p513) target = $region72
        $region71: #{tpu_custom_call.1} parent=55 // pred_region
          %516 = dma.done %s509, 2048
        $region72: #{tpu_custom_call.1} parent=55 // pred_fallthru
          _
        %s517 = sand.u32 %s37, 1
        %s518 = scalar_lea.sflag [#allocation10], %s517
        %s519 = sand.u32 %s164, 1
        %s520 = scalar_lea.vmem [#allocation11], %s519
        // Predicated region
        $region73: #{tpu_custom_call.1} parent=55 // pred_check
          %p521 = pneg %p177
        $region74: #{tpu_custom_call.1} parent=55 // pred_check_branch
          %523 = sbr.rel (%p521) target = $region76
        $region75: #{tpu_custom_call.1} parent=55 // pred_region
          %524 = dma.done %s518, 16
        $region76: #{tpu_custom_call.1} parent=55 // pred_fallthru
          _
        // Predicated region
        $region77: #{tpu_custom_call.1} parent=55 // pred_check
          %p525 = pneg %p198
        $region78: #{tpu_custom_call.1} parent=55 // pred_check_branch
          %527 = sbr.rel (%p525) target = $region80
        $region79: #{tpu_custom_call.1} parent=55 // pred_region
          %528 = dma.done [#allocation13], 1024
        $region80: #{tpu_custom_call.1} parent=55 // pred_fallthru
          _
        // Predicated region
        $region81: #{tpu_custom_call.1} parent=55 // pred_check
          %p529 = pneg %p219
        $region82: #{tpu_custom_call.1} parent=55 // pred_check_branch
          %531 = sbr.rel (%p529) target = $region84
        $region83: #{tpu_custom_call.1} parent=55 // pred_region
          %532 = dma.done [#allocation13], 16
        $region84: #{tpu_custom_call.1} parent=55 // pred_fallthru
          _
        // Predicated region
        $region85: #{tpu_custom_call.1} parent=55 // pred_check
          %p533 = pneg %p240
        $region86: #{tpu_custom_call.1} parent=55 // pred_check_branch
          %535 = sbr.rel (%p533) target = $region88
        $region87: #{tpu_custom_call.1} parent=55 // pred_region
          %536 = dma.done [#allocation16], 1024
        $region88: #{tpu_custom_call.1} parent=55 // pred_fallthru
          _
        // Predicated region
        $region89: #{tpu_custom_call.1} parent=55 // pred_check
          %p537 = pneg %p261
        $region90: #{tpu_custom_call.1} parent=55 // pred_check_branch
          %539 = sbr.rel (%p537) target = $region92
        $region91: #{tpu_custom_call.1} parent=55 // pred_region
          %540 = dma.done [#allocation16], 16
        $region92: #{tpu_custom_call.1} parent=55 // pred_fallthru
          _
        %p541 = pneg %p65
        %p542 = pneg %p62
        %s543 = sand.u32 %s37, 1
        %s544 = scalar_lea.sflag [#allocation7], %s543
        %s545 = sand.u32 %s80, 1
        %s546 = smul.addr %s545, 64
        %s547 = scalar_lea.vmem [#allocation6], %s546
        %p548 = pneg %p93
        %p549 = pneg %p90
        %s550 = sand.u32 %s37, 1
        %s551 = scalar_lea.sflag [#allocation7], %s550
        %s552 = sand.u32 %s108, 1
        %s553 = smul.addr %s552, 128
        %s554 = scalar_lea.vmem [#allocation8], %s553
        %p555 = pneg %p121
        %p556 = pneg %p118
        %s557 = sand.u32 %s37, 1
        %s558 = scalar_lea.sflag [#allocation10], %s557
        %s559 = sand.u32 %s136, 1
        %s560 = smul.addr %s559, 128
        %s561 = scalar_lea.vmem [#allocation9], %s560
        %p562 = pneg %p149
        %p563 = pneg %p146
        %s564 = sand.u32 %s37, 1
        %s565 = scalar_lea.sflag [#allocation10], %s564
        %s566 = sand.u32 %s164, 1
        %s567 = scalar_lea.vmem [#allocation11], %s566
        %p568 = pneg %p177
        %p569 = pneg %p174
        %p570 = pneg %p198
        %p571 = pneg %p195
        %p572 = pneg %p219
        %p573 = pneg %p216
        %p574 = pneg %p240
        %p575 = pneg %p237
        %p576 = pneg %p261
        %p577 = pneg %p258
        %p578 = pneg %p289
        %p579 = pneg %p286
        %s580 = sand.u32 %s276, 1
        %s581 = scalar_lea.sflag [#allocation5], %s580
        %s582 = sand.u32 %s276, 1
        %s583 = smul.addr %s582, 64
        %s584 = scalar_lea.vmem [#allocation18], %s583
        %p585 = pneg %p315
        %p586 = pneg %p312
        %s587 = sand.u32 %s302, 1
        %s588 = scalar_lea.sflag [#allocation20], %s587
        %s589 = sand.u32 %s302, 1
        %s590 = smul.addr %s589, 128
        %s591 = scalar_lea.vmem [#allocation19], %s590
        %s592 = sadd.s32 %s41, %s42
        %s593 = smul.u32 16, %s592
        %s594 = sadd.s32 %s41, %s42
        %s595 = smul.u32 16, %s594
        %s596 = sadd.s32 %s41, %s42
        %s597 = smul.u32 16, %s596
        %s598 = sadd.s32 %s41, %s42
        %s599 = sadd.s32 %s41, %s42
        %s600 = smul.u32 16, %s599
        %s601 = smul.u32 16, %s41
        %p603 = scmp.eq.s32.totalorder %s42, 0
        // Predicated region
        $region93: #{tpu_custom_call.1} parent=55 // pred_check
          %p604 = pneg %p603
        $region94: #{tpu_custom_call.1} parent=55 // pred_check_branch
          %606 = sbr.rel (%p604) target = $region96
        $region95: #{tpu_custom_call.1} parent=55 // pred_region
          %v607 = vld [vmem:[#allocation12] sm:$0xf]
          %v608 = vld [vmem:[#allocation12 + $0x4] sm:$0xf]
          %v609 = vld [vmem:[#allocation12 + $0x8] sm:$0xf]
          %v610 = vld [vmem:[#allocation12 + $0xc] sm:$0xf]
          %v611 = vld [vmem:[#allocation12 + $0x10] sm:$0xf]
          %v612 = vld [vmem:[#allocation12 + $0x14] sm:$0xf]
          %v613 = vld [vmem:[#allocation12 + $0x18] sm:$0xf]
          %v614 = vld [vmem:[#allocation12 + $0x1c] sm:$0xf]
          %v615 = vld [vmem:[#allocation12 + $0x20] sm:$0xf]
          %v616 = vld [vmem:[#allocation12 + $0x24] sm:$0xf]
          %v617 = vld [vmem:[#allocation12 + $0x28] sm:$0xf]
          %v618 = vld [vmem:[#allocation12 + $0x2c] sm:$0xf]
          %v619 = vld [vmem:[#allocation12 + $0x30] sm:$0xf]
          %v620 = vld [vmem:[#allocation12 + $0x34] sm:$0xf]
          %v621 = vld [vmem:[#allocation12 + $0x38] sm:$0xf]
          %v622 = vld [vmem:[#allocation12 + $0x3c] sm:$0xf]
          %v639 = vunpack.c.l.b16 %v607
          %v640 = vunpack.c.l.b16 %v608
          %v641 = vunpack.c.l.b16 %v609
          %v642 = vunpack.c.l.b16 %v610
          %v643 = vunpack.c.l.b16 %v611
          %v644 = vunpack.c.l.b16 %v612
          %v645 = vunpack.c.l.b16 %v613
          %v646 = vunpack.c.l.b16 %v614
          %v647 = vunpack.c.l.b16 %v615
          %v648 = vunpack.c.l.b16 %v616
          %v649 = vunpack.c.l.b16 %v617
          %v650 = vunpack.c.l.b16 %v618
          %v651 = vunpack.c.l.b16 %v619
          %v652 = vunpack.c.l.b16 %v620
          %v653 = vunpack.c.l.b16 %v621
          %v654 = vunpack.c.l.b16 %v622
          %v655 = vpack.c.b16 %v640, %v639
          %v656 = vpack.c.b16 %v642, %v641
          %v657 = vpack.c.b16 %v644, %v643
          %v658 = vpack.c.b16 %v646, %v645
          %v659 = vpack.c.b16 %v648, %v647
          %v660 = vpack.c.b16 %v650, %v649
          %v661 = vpack.c.b16 %v652, %v651
          %v662 = vpack.c.b16 %v654, %v653
          %671 = vst [vmem:[#allocation2] sm:$0xff] %v655
          %672 = vst [vmem:[#allocation2 + $0x8] sm:$0xff] %v656
          %673 = vst [vmem:[#allocation2 + $0x10] sm:$0xff] %v657
          %674 = vst [vmem:[#allocation2 + $0x18] sm:$0xff] %v658
          %675 = vst [vmem:[#allocation2 + $0x20] sm:$0xff] %v659
          %676 = vst [vmem:[#allocation2 + $0x28] sm:$0xff] %v660
          %677 = vst [vmem:[#allocation2 + $0x30] sm:$0xff] %v661
          %678 = vst [vmem:[#allocation2 + $0x38] sm:$0xff] %v662
          %v679 = vld [vmem:[#allocation3] sm:$0xf]
          %v680 = vld [vmem:[#allocation3 + $0x4] sm:$0xf]
          %v681 = vld [vmem:[#allocation3 + $0x8] sm:$0xf]
          %v682 = vld [vmem:[#allocation3 + $0xc] sm:$0xf]
          %v683 = vld [vmem:[#allocation3 + $0x10] sm:$0xf]
          %v684 = vld [vmem:[#allocation3 + $0x14] sm:$0xf]
          %v685 = vld [vmem:[#allocation3 + $0x18] sm:$0xf]
          %v686 = vld [vmem:[#allocation3 + $0x1c] sm:$0xf]
          %v687 = vld [vmem:[#allocation3 + $0x20] sm:$0xf]
          %v688 = vld [vmem:[#allocation3 + $0x24] sm:$0xf]
          %v689 = vld [vmem:[#allocation3 + $0x28] sm:$0xf]
          %v690 = vld [vmem:[#allocation3 + $0x2c] sm:$0xf]
          %v691 = vld [vmem:[#allocation3 + $0x30] sm:$0xf]
          %v692 = vld [vmem:[#allocation3 + $0x34] sm:$0xf]
          %v693 = vld [vmem:[#allocation3 + $0x38] sm:$0xf]
          %v694 = vld [vmem:[#allocation3 + $0x3c] sm:$0xf]
          %v695 = vld [vmem:[#allocation15] sm:$0xf]
          %v696 = vld [vmem:[#allocation15 + $0x4] sm:$0xf]
          %v697 = vld [vmem:[#allocation15 + $0x8] sm:$0xf]
          %v698 = vld [vmem:[#allocation15 + $0xc] sm:$0xf]
          %v699 = vld [vmem:[#allocation15 + $0x10] sm:$0xf]
          %v700 = vld [vmem:[#allocation15 + $0x14] sm:$0xf]
          %v701 = vld [vmem:[#allocation15 + $0x18] sm:$0xf]
          %v702 = vld [vmem:[#allocation15 + $0x1c] sm:$0xf]
          %v703 = vld [vmem:[#allocation15 + $0x20] sm:$0xf]
          %v704 = vld [vmem:[#allocation15 + $0x24] sm:$0xf]
          %v705 = vld [vmem:[#allocation15 + $0x28] sm:$0xf]
          %v706 = vld [vmem:[#allocation15 + $0x2c] sm:$0xf]
          %v707 = vld [vmem:[#allocation15 + $0x30] sm:$0xf]
          %v708 = vld [vmem:[#allocation15 + $0x34] sm:$0xf]
          %v709 = vld [vmem:[#allocation15 + $0x38] sm:$0xf]
          %v710 = vld [vmem:[#allocation15 + $0x3c] sm:$0xf]
          %v711 = vld [vmem:[#allocation17] sm:$0x1]
          %v713 = vlaneseq
          %v714 = vshrl.u32 %v713, 7
          %v715 = vsub.s32 0, %v714
          %v716 = vrot.slane %v711, %v715
          %v734 = vunpack.c.l.b16 %v679
          %v735 = vunpack.c.l.b16 %v680
          %v736 = vunpack.c.l.b16 %v681
          %v737 = vunpack.c.l.b16 %v682
          %v738 = vunpack.c.l.b16 %v683
          %v739 = vunpack.c.l.b16 %v684
          %v740 = vunpack.c.l.b16 %v685
          %v741 = vunpack.c.l.b16 %v686
          %v742 = vunpack.c.l.b16 %v687
          %v743 = vunpack.c.l.b16 %v688
          %v744 = vunpack.c.l.b16 %v689
          %v745 = vunpack.c.l.b16 %v690
          %v746 = vunpack.c.l.b16 %v691
          %v747 = vunpack.c.l.b16 %v692
          %v748 = vunpack.c.l.b16 %v693
          %v749 = vunpack.c.l.b16 %v694
          %v750 = vpack.c.b16 %v735, %v734
          %v751 = vpack.c.b16 %v737, %v736
          %v752 = vpack.c.b16 %v739, %v738
          %v753 = vpack.c.b16 %v741, %v740
          %v754 = vpack.c.b16 %v743, %v742
          %v755 = vpack.c.b16 %v745, %v744
          %v756 = vpack.c.b16 %v747, %v746
          %v757 = vpack.c.b16 %v749, %v748
          %v782 = vunpack.c.l.b16 %v695
          %v783 = vunpack.c.l.b16 %v696
          %v784 = vunpack.c.l.b16 %v697
          %v785 = vunpack.c.l.b16 %v698
          %v786 = vunpack.c.l.b16 %v699
          %v787 = vunpack.c.l.b16 %v700
          %v788 = vunpack.c.l.b16 %v701
          %v789 = vunpack.c.l.b16 %v702
          %v790 = vunpack.c.l.b16 %v703
          %v791 = vunpack.c.l.b16 %v704
          %v792 = vunpack.c.l.b16 %v705
          %v793 = vunpack.c.l.b16 %v706
          %v794 = vunpack.c.l.b16 %v707
          %v795 = vunpack.c.l.b16 %v708
          %v796 = vunpack.c.l.b16 %v709
          %v797 = vunpack.c.l.b16 %v710
          %v798 = vpack.c.b16 %v783, %v782
          %v799 = vpack.c.b16 %v785, %v784
          %v800 = vpack.c.b16 %v787, %v786
          %v801 = vpack.c.b16 %v789, %v788
          %v802 = vpack.c.b16 %v791, %v790
          %v803 = vpack.c.b16 %v793, %v792
          %v804 = vpack.c.b16 %v795, %v794
          %v805 = vpack.c.b16 %v797, %v796
          %814 = vmatprep.subr.bf16.mxu0 0
          %815 = vmatpush1.bf16.msra.mxu0 %v798
          %816 = vmatprep.subr.bf16.mxu0 0
          %817 = vmatpush1.bf16.msra.mxu0 %v799
          %818 = vmatprep.subr.bf16.mxu0 0
          %819 = vmatpush1.bf16.msra.mxu0 %v800
          %820 = vmatprep.subr.bf16.mxu0 0
          %821 = vmatpush1.bf16.msra.mxu0 %v801
          %822 = vmatprep.subr.bf16.mxu0 0
          %823 = vmatpush1.bf16.msra.mxu0 %v802
          %824 = vmatprep.subr.bf16.mxu0 0
          %825 = vmatpush1.bf16.msra.mxu0 %v803
          %826 = vmatprep.subr.bf16.mxu0 0
          %827 = vmatpush1.bf16.msra.mxu0 %v804
          %828 = vmatprep.subr.bf16.mxu0 0
          %829 = vmatpush1.bf16.msra.mxu0 %v805
          %830 = vmatprep.subr.bf16.mxu0 0
          %831 = vmatpush1.bf16.msra.mxu0 0
          %832 = vmatprep.subr.bf16.mxu0 0
          %833 = vmatpush1.bf16.msra.mxu0 0
          %834 = vmatprep.subr.bf16.mxu0 0
          %835 = vmatpush1.bf16.msra.mxu0 0
          %836 = vmatprep.subr.bf16.mxu0 0
          %837 = vmatpush1.bf16.msra.mxu0 0
          %838 = vmatprep.subr.bf16.mxu0 0
          %839 = vmatpush1.bf16.msra.mxu0 0
          %840 = vmatprep.subr.bf16.mxu0 0
          %841 = vmatpush1.bf16.msra.mxu0 0
          %842 = vmatprep.subr.bf16.mxu0 0
          %843 = vmatpush1.bf16.msra.mxu0 0
          %844 = vmatprep.subr.bf16.mxu0 0
          %845 = vmatpush1.bf16.msra.mxu0 0
          %846 = vmatprep.mubr.bf16.mxu0 0
          %847 = vmatmul.mubr.bf16.gmra.mrb[0].mxu0 %v750
          %v848 = vpop.f32.mrb[0].mxu0
          %v849 = vadd.f32 %v716, %v848
          %v850 = vpop.f32.mrb[0].mxu0
          %v851 = vpop.f32.mrb[0].mxu0
          %v852 = vadd.f32 %v716, %v851
          %v853 = vpop.f32.mrb[0].mxu0
          %854 = vmatprep.mubr.bf16.mxu0 0
          %855 = vmatmul.mubr.bf16.gmra.mrb[0].mxu0 %v751
          %v856 = vpop.f32.mrb[0].mxu0
          %v857 = vadd.f32 %v716, %v856
          %v858 = vpop.f32.mrb[0].mxu0
          %v859 = vpop.f32.mrb[0].mxu0
          %v860 = vadd.f32 %v716, %v859
          %v861 = vpop.f32.mrb[0].mxu0
          %862 = vmatprep.mubr.bf16.mxu0 0
          %863 = vmatmul.mubr.bf16.gmra.mrb[0].mxu0 %v752
          %v864 = vpop.f32.mrb[0].mxu0
          %v865 = vadd.f32 %v716, %v864
          %v866 = vpop.f32.mrb[0].mxu0
          %v867 = vpop.f32.mrb[0].mxu0
          %v868 = vadd.f32 %v716, %v867
          %v869 = vpop.f32.mrb[0].mxu0
          %870 = vmatprep.mubr.bf16.mxu0 0
          %871 = vmatmul.mubr.bf16.gmra.mrb[0].mxu0 %v753
          %v872 = vpop.f32.mrb[0].mxu0
          %v873 = vadd.f32 %v716, %v872
          %v874 = vpop.f32.mrb[0].mxu0
          %v875 = vpop.f32.mrb[0].mxu0
          %v876 = vadd.f32 %v716, %v875
          %v877 = vpop.f32.mrb[0].mxu0
          %878 = vmatprep.mubr.bf16.mxu0 0
          %879 = vmatmul.mubr.bf16.gmra.mrb[0].mxu0 %v754
          %v880 = vpop.f32.mrb[0].mxu0
          %v881 = vadd.f32 %v716, %v880
          %v882 = vpop.f32.mrb[0].mxu0
          %v883 = vpop.f32.mrb[0].mxu0
          %v884 = vadd.f32 %v716, %v883
          %v885 = vpop.f32.mrb[0].mxu0
          %886 = vmatprep.mubr.bf16.mxu0 0
          %887 = vmatmul.mubr.bf16.gmra.mrb[0].mxu0 %v755
          %v888 = vpop.f32.mrb[0].mxu0
          %v889 = vadd.f32 %v716, %v888
          %v890 = vpop.f32.mrb[0].mxu0
          %v891 = vpop.f32.mrb[0].mxu0
          %v892 = vadd.f32 %v716, %v891
          %v893 = vpop.f32.mrb[0].mxu0
          %894 = vmatprep.mubr.bf16.mxu0 0
          %895 = vmatmul.mubr.bf16.gmra.mrb[0].mxu0 %v756
          %v896 = vpop.f32.mrb[0].mxu0
          %v897 = vadd.f32 %v716, %v896
          %v898 = vpop.f32.mrb[0].mxu0
          %v899 = vpop.f32.mrb[0].mxu0
          %v900 = vadd.f32 %v716, %v899
          %v901 = vpop.f32.mrb[0].mxu0
          %902 = vmatprep.mubr.bf16.mxu0 0
          %903 = vmatmul.mubr.bf16.gmra.mrb[0].mxu0 %v757
          %v904 = vpop.f32.mrb[0].mxu0
          %v905 = vadd.f32 %v716, %v904
          %v906 = vpop.f32.mrb[0].mxu0
          %v907 = vpop.f32.mrb[0].mxu0
          %v908 = vadd.f32 %v716, %v907
          %v909 = vpop.f32.mrb[0].mxu0
          %910 = vdwg.mxu0
          %v911 = vpack.c.bf16 %v852, %v849
          %v912 = vpack.c.bf16 %v860, %v857
          %v913 = vpack.c.bf16 %v868, %v865
          %v914 = vpack.c.bf16 %v876, %v873
          %v915 = vpack.c.bf16 %v884, %v881
          %v916 = vpack.c.bf16 %v892, %v889
          %v917 = vpack.c.bf16 %v900, %v897
          %v918 = vpack.c.bf16 %v908, %v905
          %919 = vst [vmem:[#allocation2 + $0x40] sm:$0xff] %v911
          %920 = vst [vmem:[#allocation2 + $0x48] sm:$0xff] %v912
          %921 = vst [vmem:[#allocation2 + $0x50] sm:$0xff] %v913
          %922 = vst [vmem:[#allocation2 + $0x58] sm:$0xff] %v914
          %923 = vst [vmem:[#allocation2 + $0x60] sm:$0xff] %v915
          %924 = vst [vmem:[#allocation2 + $0x68] sm:$0xff] %v916
          %925 = vst [vmem:[#allocation2 + $0x70] sm:$0xff] %v917
          %926 = vst [vmem:[#allocation2 + $0x78] sm:$0xff] %v918
          %927 = vst [vmem:[%s591] sm:$0xff] 0.0
          %928 = vst [vmem:[%s591 + $0x8] sm:$0xff] 0.0
          %929 = vst [vmem:[%s591 + $0x10] sm:$0xff] 0.0
          %930 = vst [vmem:[%s591 + $0x18] sm:$0xff] 0.0
          %931 = vst [vmem:[%s591 + $0x20] sm:$0xff] 0.0
          %932 = vst [vmem:[%s591 + $0x28] sm:$0xff] 0.0
          %933 = vst [vmem:[%s591 + $0x30] sm:$0xff] 0.0
          %934 = vst [vmem:[%s591 + $0x38] sm:$0xff] 0.0
          %935 = vst [vmem:[%s591 + $0x40] sm:$0xff] 0.0
          %936 = vst [vmem:[%s591 + $0x48] sm:$0xff] 0.0
          %937 = vst [vmem:[%s591 + $0x50] sm:$0xff] 0.0
          %938 = vst [vmem:[%s591 + $0x58] sm:$0xff] 0.0
          %939 = vst [vmem:[%s591 + $0x60] sm:$0xff] 0.0
          %940 = vst [vmem:[%s591 + $0x68] sm:$0xff] 0.0
          %941 = vst [vmem:[%s591 + $0x70] sm:$0xff] 0.0
          %942 = vst [vmem:[%s591 + $0x78] sm:$0xff] 0.0
        $region96: #{tpu_custom_call.1} parent=55 // pred_fallthru
          _
        %v943 = vlaneseq
        %v944 = vand.u32 %v943, 127
        %v945 = vld [vmem:[%s503] sm:$0xff]
        %v946 = vld [vmem:[%s503 + $0x8] sm:$0xff]
        %v947 = vld [vmem:[%s503 + $0x10] sm:$0xff]
        %v948 = vld [vmem:[%s503 + $0x18] sm:$0xff]
        %v949 = vld [vmem:[%s503 + $0x20] sm:$0xff]
        %v950 = vld [vmem:[%s503 + $0x28] sm:$0xff]
        %v951 = vld [vmem:[%s503 + $0x30] sm:$0xff]
        %v952 = vld [vmem:[%s503 + $0x38] sm:$0xff]
        %v953 = vld [vmem:[%s503 + $0x40] sm:$0xff]
        %v954 = vld [vmem:[%s503 + $0x48] sm:$0xff]
        %v955 = vld [vmem:[%s503 + $0x50] sm:$0xff]
        %v956 = vld [vmem:[%s503 + $0x58] sm:$0xff]
        %v957 = vld [vmem:[%s503 + $0x60] sm:$0xff]
        %v958 = vld [vmem:[%s503 + $0x68] sm:$0xff]
        %v959 = vld [vmem:[%s503 + $0x70] sm:$0xff]
        %v960 = vld [vmem:[%s503 + $0x78] sm:$0xff]
        %961 = vset.pattern.permute.xlu0 0
        %962 = vperm.xlu0 %961, %v945
        %v963 = vpop.permute.xlu0 %962
        %964 = vset.pattern.permute.xlu0 0
        %965 = vperm.xlu0 %964, %v946
        %v966 = vpop.permute.xlu0 %965
        %967 = vset.pattern.permute.xlu0 0
        %968 = vperm.xlu0 %967, %v947
        %v969 = vpop.permute.xlu0 %968
        %970 = vset.pattern.permute.xlu0 0
        %971 = vperm.xlu0 %970, %v948
        %v972 = vpop.permute.xlu0 %971
        %973 = vset.pattern.permute.xlu0 0
        %974 = vperm.xlu0 %973, %v949
        %v975 = vpop.permute.xlu0 %974
        %976 = vset.pattern.permute.xlu0 0
        %977 = vperm.xlu0 %976, %v950
        %v978 = vpop.permute.xlu0 %977
        %979 = vset.pattern.permute.xlu0 0
        %980 = vperm.xlu0 %979, %v951
        %v981 = vpop.permute.xlu0 %980
        %982 = vset.pattern.permute.xlu0 0
        %983 = vperm.xlu0 %982, %v952
        %v984 = vpop.permute.xlu0 %983
        %985 = vset.pattern.permute.xlu0 0
        %986 = vperm.xlu0 %985, %v953
        %v987 = vpop.permute.xlu0 %986
        %988 = vset.pattern.permute.xlu0 0
        %989 = vperm.xlu0 %988, %v954
        %v990 = vpop.permute.xlu0 %989
        %991 = vset.pattern.permute.xlu0 0
        %992 = vperm.xlu0 %991, %v955
        %v993 = vpop.permute.xlu0 %992
        %994 = vset.pattern.permute.xlu0 0
        %995 = vperm.xlu0 %994, %v956
        %v996 = vpop.permute.xlu0 %995
        %997 = vset.pattern.permute.xlu0 0
        %998 = vperm.xlu0 %997, %v957
        %v999 = vpop.permute.xlu0 %998
        %1000 = vset.pattern.permute.xlu0 0
        %1001 = vperm.xlu0 %1000, %v958
        %v1002 = vpop.permute.xlu0 %1001
        %1003 = vset.pattern.permute.xlu0 0
        %1004 = vperm.xlu0 %1003, %v959
        %v1005 = vpop.permute.xlu0 %1004
        %1006 = vset.pattern.permute.xlu0 0
        %1007 = vperm.xlu0 %1006, %v960
        %v1008 = vpop.permute.xlu0 %1007
        %vm1009 = vcmp.eq.s32.totalorder %v963, %v944
        %vm1010 = vcmp.eq.s32.totalorder %v966, %v944
        %vm1011 = vcmp.eq.s32.totalorder %v969, %v944
        %vm1012 = vcmp.eq.s32.totalorder %v972, %v944
        %vm1013 = vcmp.eq.s32.totalorder %v975, %v944
        %vm1014 = vcmp.eq.s32.totalorder %v978, %v944
        %vm1015 = vcmp.eq.s32.totalorder %v981, %v944
        %vm1016 = vcmp.eq.s32.totalorder %v984, %v944
        %vm1017 = vcmp.eq.s32.totalorder %v987, %v944
        %vm1018 = vcmp.eq.s32.totalorder %v990, %v944
        %vm1019 = vcmp.eq.s32.totalorder %v993, %v944
        %vm1020 = vcmp.eq.s32.totalorder %v996, %v944
        %vm1021 = vcmp.eq.s32.totalorder %v999, %v944
        %vm1022 = vcmp.eq.s32.totalorder %v1002, %v944
        %vm1023 = vcmp.eq.s32.totalorder %v1005, %v944
        %vm1024 = vcmp.eq.s32.totalorder %v1008, %v944
        %v1025 = vsel %vm1009, 1, 0
        %v1026 = vsel %vm1010, 1, 0
        %v1027 = vsel %vm1011, 1, 0
        %v1028 = vsel %vm1012, 1, 0
        %v1029 = vsel %vm1013, 1, 0
        %v1030 = vsel %vm1014, 1, 0
        %v1031 = vsel %vm1015, 1, 0
        %v1032 = vsel %vm1016, 1, 0
        %v1033 = vsel %vm1017, 1, 0
        %v1034 = vsel %vm1018, 1, 0
        %v1035 = vsel %vm1019, 1, 0
        %v1036 = vsel %vm1020, 1, 0
        %v1037 = vsel %vm1021, 1, 0
        %v1038 = vsel %vm1022, 1, 0
        %v1039 = vsel %vm1023, 1, 0
        %v1040 = vsel %vm1024, 1, 0
        %v1041 = vcvt.s32.f32 %v1025
        %v1042 = vcvt.s32.f32 %v1026
        %v1043 = vcvt.s32.f32 %v1027
        %v1044 = vcvt.s32.f32 %v1028
        %v1045 = vcvt.s32.f32 %v1029
        %v1046 = vcvt.s32.f32 %v1030
        %v1047 = vcvt.s32.f32 %v1031
        %v1048 = vcvt.s32.f32 %v1032
        %v1049 = vcvt.s32.f32 %v1033
        %v1050 = vcvt.s32.f32 %v1034
        %v1051 = vcvt.s32.f32 %v1035
        %v1052 = vcvt.s32.f32 %v1036
        %v1053 = vcvt.s32.f32 %v1037
        %v1054 = vcvt.s32.f32 %v1038
        %v1055 = vcvt.s32.f32 %v1039
        %v1056 = vcvt.s32.f32 %v1040
        %v1057 = vpack.c.bf16 %v1042, %v1041
        %v1058 = vpack.c.bf16 %v1044, %v1043
        %v1059 = vpack.c.bf16 %v1046, %v1045
        %v1060 = vpack.c.bf16 %v1048, %v1047
        %v1061 = vpack.c.bf16 %v1050, %v1049
        %v1062 = vpack.c.bf16 %v1052, %v1051
        %v1063 = vpack.c.bf16 %v1054, %v1053
        %v1064 = vpack.c.bf16 %v1056, %v1055
        %v1065 = vld [vmem:[%s512] sm:$0xff]
        %v1066 = vld [vmem:[%s512 + $0x8] sm:$0xff]
        %v1067 = vld [vmem:[%s512 + $0x10] sm:$0xff]
        %v1068 = vld [vmem:[%s512 + $0x18] sm:$0xff]
        %v1069 = vld [vmem:[%s512 + $0x20] sm:$0xff]
        %v1070 = vld [vmem:[%s512 + $0x28] sm:$0xff]
        %v1071 = vld [vmem:[%s512 + $0x30] sm:$0xff]
        %v1072 = vld [vmem:[%s512 + $0x38] sm:$0xff]
        %v1073 = vld [vmem:[%s512 + $0x40] sm:$0xff]
        %v1074 = vld [vmem:[%s512 + $0x48] sm:$0xff]
        %v1075 = vld [vmem:[%s512 + $0x50] sm:$0xff]
        %v1076 = vld [vmem:[%s512 + $0x58] sm:$0xff]
        %v1077 = vld [vmem:[%s512 + $0x60] sm:$0xff]
        %v1078 = vld [vmem:[%s512 + $0x68] sm:$0xff]
        %v1079 = vld [vmem:[%s512 + $0x70] sm:$0xff]
        %v1080 = vld [vmem:[%s512 + $0x78] sm:$0xff]
        %1081 = vset.pattern.permute.xlu0 0
        %1082 = vperm.xlu0 %1081, %v1065
        %v1083 = vpop.permute.xlu0 %1082
        %1084 = vset.pattern.permute.xlu0 0
        %1085 = vperm.xlu0 %1084, %v1066
        %v1086 = vpop.permute.xlu0 %1085
        %1087 = vset.pattern.permute.xlu0 0
        %1088 = vperm.xlu0 %1087, %v1067
        %v1089 = vpop.permute.xlu0 %1088
        %1090 = vset.pattern.permute.xlu0 0
        %1091 = vperm.xlu0 %1090, %v1068
        %v1092 = vpop.permute.xlu0 %1091
        %1093 = vset.pattern.permute.xlu0 0
        %1094 = vperm.xlu0 %1093, %v1069
        %v1095 = vpop.permute.xlu0 %1094
        %1096 = vset.pattern.permute.xlu0 0
        %1097 = vperm.xlu0 %1096, %v1070
        %v1098 = vpop.permute.xlu0 %1097
        %1099 = vset.pattern.permute.xlu0 0
        %1100 = vperm.xlu0 %1099, %v1071
        %v1101 = vpop.permute.xlu0 %1100
        %1102 = vset.pattern.permute.xlu0 0
        %1103 = vperm.xlu0 %1102, %v1072
        %v1104 = vpop.permute.xlu0 %1103
        %1105 = vset.pattern.permute.xlu0 0
        %1106 = vperm.xlu0 %1105, %v1073
        %v1107 = vpop.permute.xlu0 %1106
        %1108 = vset.pattern.permute.xlu0 0
        %1109 = vperm.xlu0 %1108, %v1074
        %v1110 = vpop.permute.xlu0 %1109
        %1111 = vset.pattern.permute.xlu0 0
        %1112 = vperm.xlu0 %1111, %v1075
        %v1113 = vpop.permute.xlu0 %1112
        %1114 = vset.pattern.permute.xlu0 0
        %1115 = vperm.xlu0 %1114, %v1076
        %v1116 = vpop.permute.xlu0 %1115
        %1117 = vset.pattern.permute.xlu0 0
        %1118 = vperm.xlu0 %1117, %v1077
        %v1119 = vpop.permute.xlu0 %1118
        %1120 = vset.pattern.permute.xlu0 0
        %1121 = vperm.xlu0 %1120, %v1078
        %v1122 = vpop.permute.xlu0 %1121
        %1123 = vset.pattern.permute.xlu0 0
        %1124 = vperm.xlu0 %1123, %v1079
        %v1125 = vpop.permute.xlu0 %1124
        %1126 = vset.pattern.permute.xlu0 0
        %1127 = vperm.xlu0 %1126, %v1080
        %v1128 = vpop.permute.xlu0 %1127
        %vm1129 = vcmp.eq.s32.totalorder %v1083, %v944
        %vm1130 = vcmp.eq.s32.totalorder %v1086, %v944
        %vm1131 = vcmp.eq.s32.totalorder %v1089, %v944
        %vm1132 = vcmp.eq.s32.totalorder %v1092, %v944
        %vm1133 = vcmp.eq.s32.totalorder %v1095, %v944
        %vm1134 = vcmp.eq.s32.totalorder %v1098, %v944
        %vm1135 = vcmp.eq.s32.totalorder %v1101, %v944
        %vm1136 = vcmp.eq.s32.totalorder %v1104, %v944
        %vm1137 = vcmp.eq.s32.totalorder %v1107, %v944
        %vm1138 = vcmp.eq.s32.totalorder %v1110, %v944
        %vm1139 = vcmp.eq.s32.totalorder %v1113, %v944
        %vm1140 = vcmp.eq.s32.totalorder %v1116, %v944
        %vm1141 = vcmp.eq.s32.totalorder %v1119, %v944
        %vm1142 = vcmp.eq.s32.totalorder %v1122, %v944
        %vm1143 = vcmp.eq.s32.totalorder %v1125, %v944
        %vm1144 = vcmp.eq.s32.totalorder %v1128, %v944
        %v1145 = vsel %vm1129, 1, 0
        %v1146 = vsel %vm1130, 1, 0
        %v1147 = vsel %vm1131, 1, 0
        %v1148 = vsel %vm1132, 1, 0
        %v1149 = vsel %vm1133, 1, 0
        %v1150 = vsel %vm1134, 1, 0
        %v1151 = vsel %vm1135, 1, 0
        %v1152 = vsel %vm1136, 1, 0
        %v1153 = vsel %vm1137, 1, 0
        %v1154 = vsel %vm1138, 1, 0
        %v1155 = vsel %vm1139, 1, 0
        %v1156 = vsel %vm1140, 1, 0
        %v1157 = vsel %vm1141, 1, 0
        %v1158 = vsel %vm1142, 1, 0
        %v1159 = vsel %vm1143, 1, 0
        %v1160 = vsel %vm1144, 1, 0
        %v1161 = vcvt.s32.f32 %v1145
        %v1162 = vcvt.s32.f32 %v1146
        %v1163 = vcvt.s32.f32 %v1147
        %v1164 = vcvt.s32.f32 %v1148
        %v1165 = vcvt.s32.f32 %v1149
        %v1166 = vcvt.s32.f32 %v1150
        %v1167 = vcvt.s32.f32 %v1151
        %v1168 = vcvt.s32.f32 %v1152
        %v1169 = vcvt.s32.f32 %v1153
        %v1170 = vcvt.s32.f32 %v1154
        %v1171 = vcvt.s32.f32 %v1155
        %v1172 = vcvt.s32.f32 %v1156
        %v1173 = vcvt.s32.f32 %v1157
        %v1174 = vcvt.s32.f32 %v1158
        %v1175 = vcvt.s32.f32 %v1159
        %v1176 = vcvt.s32.f32 %v1160
        %v1177 = vpack.c.bf16 %v1162, %v1161
        %v1178 = vpack.c.bf16 %v1164, %v1163
        %v1179 = vpack.c.bf16 %v1166, %v1165
        %v1180 = vpack.c.bf16 %v1168, %v1167
        %v1181 = vpack.c.bf16 %v1170, %v1169
        %v1182 = vpack.c.bf16 %v1172, %v1171
        %v1183 = vpack.c.bf16 %v1174, %v1173
        %v1184 = vpack.c.bf16 %v1176, %v1175
        %v1185 = vadd.bf16 %v1057, %v1177
        %v1186 = vadd.bf16 %v1058, %v1178
        %v1187 = vadd.bf16 %v1059, %v1179
        %v1188 = vadd.bf16 %v1060, %v1180
        %v1189 = vadd.bf16 %v1061, %v1181
        %v1190 = vadd.bf16 %v1062, %v1182
        %v1191 = vadd.bf16 %v1063, %v1183
        %v1192 = vadd.bf16 %v1064, %v1184
        %v1193 = vld [vmem:[%s494] sm:$0xf]
        %v1194 = vld [vmem:[%s494 + $0x4] sm:$0xf]
        %v1195 = vld [vmem:[%s494 + $0x8] sm:$0xf]
        %v1196 = vld [vmem:[%s494 + $0xc] sm:$0xf]
        %v1197 = vld [vmem:[%s494 + $0x10] sm:$0xf]
        %v1198 = vld [vmem:[%s494 + $0x14] sm:$0xf]
        %v1199 = vld [vmem:[%s494 + $0x18] sm:$0xf]
        %v1200 = vld [vmem:[%s494 + $0x1c] sm:$0xf]
        %v1201 = vld [vmem:[%s494 + $0x20] sm:$0xf]
        %v1202 = vld [vmem:[%s494 + $0x24] sm:$0xf]
        %v1203 = vld [vmem:[%s494 + $0x28] sm:$0xf]
        %v1204 = vld [vmem:[%s494 + $0x2c] sm:$0xf]
        %v1205 = vld [vmem:[%s494 + $0x30] sm:$0xf]
        %v1206 = vld [vmem:[%s494 + $0x34] sm:$0xf]
        %v1207 = vld [vmem:[%s494 + $0x38] sm:$0xf]
        %v1208 = vld [vmem:[%s494 + $0x3c] sm:$0xf]
        %v1225 = vunpack.c.l.b16 %v1193
        %v1226 = vunpack.c.l.b16 %v1194
        %v1227 = vunpack.c.l.b16 %v1195
        %v1228 = vunpack.c.l.b16 %v1196
        %v1229 = vunpack.c.l.b16 %v1197
        %v1230 = vunpack.c.l.b16 %v1198
        %v1231 = vunpack.c.l.b16 %v1199
        %v1232 = vunpack.c.l.b16 %v1200
        %v1233 = vunpack.c.l.b16 %v1201
        %v1234 = vunpack.c.l.b16 %v1202
        %v1235 = vunpack.c.l.b16 %v1203
        %v1236 = vunpack.c.l.b16 %v1204
        %v1237 = vunpack.c.l.b16 %v1205
        %v1238 = vunpack.c.l.b16 %v1206
        %v1239 = vunpack.c.l.b16 %v1207
        %v1240 = vunpack.c.l.b16 %v1208
        %v1241 = vpack.c.b16 %v1226, %v1225
        %v1242 = vpack.c.b16 %v1228, %v1227
        %v1243 = vpack.c.b16 %v1230, %v1229
        %v1244 = vpack.c.b16 %v1232, %v1231
        %v1245 = vpack.c.b16 %v1234, %v1233
        %v1246 = vpack.c.b16 %v1236, %v1235
        %v1247 = vpack.c.b16 %v1238, %v1237
        %v1248 = vpack.c.b16 %v1240, %v1239
        %v1257 = vld [vmem:[#allocation2] sm:$0xff]
        %v1258 = vld [vmem:[#allocation2 + $0x8] sm:$0xff]
        %v1259 = vld [vmem:[#allocation2 + $0x10] sm:$0xff]
        %v1260 = vld [vmem:[#allocation2 + $0x18] sm:$0xff]
        %v1261 = vld [vmem:[#allocation2 + $0x20] sm:$0xff]
        %v1262 = vld [vmem:[#allocation2 + $0x28] sm:$0xff]
        %v1263 = vld [vmem:[#allocation2 + $0x30] sm:$0xff]
        %v1264 = vld [vmem:[#allocation2 + $0x38] sm:$0xff]
        %v1265 = vld [vmem:[#allocation2 + $0x40] sm:$0xff]
        %v1266 = vld [vmem:[#allocation2 + $0x48] sm:$0xff]
        %v1267 = vld [vmem:[#allocation2 + $0x50] sm:$0xff]
        %v1268 = vld [vmem:[#allocation2 + $0x58] sm:$0xff]
        %v1269 = vld [vmem:[#allocation2 + $0x60] sm:$0xff]
        %v1270 = vld [vmem:[#allocation2 + $0x68] sm:$0xff]
        %v1271 = vld [vmem:[#allocation2 + $0x70] sm:$0xff]
        %v1272 = vld [vmem:[#allocation2 + $0x78] sm:$0xff]
        %v1273 = vld [vmem:[#allocation14] sm:$0x1]
        %v1275 = vlaneseq
        %v1276 = vshrl.u32 %v1275, 7
        %v1277 = vsub.s32 0, %v1276
        %v1278 = vrot.slane %v1273, %v1277
        %1280 = vmatprep.subr.bf16.mxu0 0
        %1281 = vmatpush1.bf16.msra.mxu0 %v1257
        %1282 = vmatprep.subr.bf16.mxu0 0
        %1283 = vmatpush1.bf16.msra.mxu0 %v1258
        %1284 = vmatprep.subr.bf16.mxu0 0
        %1285 = vmatpush1.bf16.msra.mxu0 %v1259
        %1286 = vmatprep.subr.bf16.mxu0 0
        %1287 = vmatpush1.bf16.msra.mxu0 %v1260
        %1288 = vmatprep.subr.bf16.mxu0 0
        %1289 = vmatpush1.bf16.msra.mxu0 %v1261
        %1290 = vmatprep.subr.bf16.mxu0 0
        %1291 = vmatpush1.bf16.msra.mxu0 %v1262
        %1292 = vmatprep.subr.bf16.mxu0 0
        %1293 = vmatpush1.bf16.msra.mxu0 %v1263
        %1294 = vmatprep.subr.bf16.mxu0 0
        %1295 = vmatpush1.bf16.msra.mxu0 %v1264
        %1296 = vmatprep.subr.bf16.mxu0 0
        %1297 = vmatpush1.bf16.msra.mxu0 %v1265
        %1298 = vmatprep.subr.bf16.mxu0 0
        %1299 = vmatpush1.bf16.msra.mxu0 %v1266
        %1300 = vmatprep.subr.bf16.mxu0 0
        %1301 = vmatpush1.bf16.msra.mxu0 %v1267
        %1302 = vmatprep.subr.bf16.mxu0 0
        %1303 = vmatpush1.bf16.msra.mxu0 %v1268
        %1304 = vmatprep.subr.bf16.mxu0 0
        %1305 = vmatpush1.bf16.msra.mxu0 %v1269
        %1306 = vmatprep.subr.bf16.mxu0 0
        %1307 = vmatpush1.bf16.msra.mxu0 %v1270
        %1308 = vmatprep.subr.bf16.mxu0 0
        %1309 = vmatpush1.bf16.msra.mxu0 %v1271
        %1310 = vmatprep.subr.bf16.mxu0 0
        %1311 = vmatpush1.bf16.msra.mxu0 %v1272
        %1312 = vmatprep.mubr.bf16.mxu0 %v1185
        %1313 = vmatmul.mubr.bf16.gmra.mrb[0].mxu0 %v1241
        %v1314 = vpop.f32.mrb[0].mxu0
        %v1315 = vadd.f32 %v1278, %v1314
        %v1316 = vpop.f32.mrb[0].mxu0
        %v1317 = vpop.f32.mrb[0].mxu0
        %v1318 = vadd.f32 %v1278, %v1317
        %v1319 = vpop.f32.mrb[0].mxu0
        %1320 = vmatprep.mubr.bf16.mxu0 %v1186
        %1321 = vmatmul.mubr.bf16.gmra.mrb[0].mxu0 %v1242
        %v1322 = vpop.f32.mrb[0].mxu0
        %v1323 = vadd.f32 %v1278, %v1322
        %v1324 = vpop.f32.mrb[0].mxu0
        %v1325 = vpop.f32.mrb[0].mxu0
        %v1326 = vadd.f32 %v1278, %v1325
        %v1327 = vpop.f32.mrb[0].mxu0
        %1328 = vmatprep.mubr.bf16.mxu0 %v1187
        %1329 = vmatmul.mubr.bf16.gmra.mrb[0].mxu0 %v1243
        %v1330 = vpop.f32.mrb[0].mxu0
        %v1331 = vadd.f32 %v1278, %v1330
        %v1332 = vpop.f32.mrb[0].mxu0
        %v1333 = vpop.f32.mrb[0].mxu0
        %v1334 = vadd.f32 %v1278, %v1333
        %v1335 = vpop.f32.mrb[0].mxu0
        %1336 = vmatprep.mubr.bf16.mxu0 %v1188
        %1337 = vmatmul.mubr.bf16.gmra.mrb[0].mxu0 %v1244
        %v1338 = vpop.f32.mrb[0].mxu0
        %v1339 = vadd.f32 %v1278, %v1338
        %v1340 = vpop.f32.mrb[0].mxu0
        %v1341 = vpop.f32.mrb[0].mxu0
        %v1342 = vadd.f32 %v1278, %v1341
        %v1343 = vpop.f32.mrb[0].mxu0
        %1344 = vmatprep.mubr.bf16.mxu0 %v1189
        %1345 = vmatmul.mubr.bf16.gmra.mrb[0].mxu0 %v1245
        %v1346 = vpop.f32.mrb[0].mxu0
        %v1347 = vadd.f32 %v1278, %v1346
        %v1348 = vpop.f32.mrb[0].mxu0
        %v1349 = vpop.f32.mrb[0].mxu0
        %v1350 = vadd.f32 %v1278, %v1349
        %v1351 = vpop.f32.mrb[0].mxu0
        %1352 = vmatprep.mubr.bf16.mxu0 %v1190
        %1353 = vmatmul.mubr.bf16.gmra.mrb[0].mxu0 %v1246
        %v1354 = vpop.f32.mrb[0].mxu0
        %v1355 = vadd.f32 %v1278, %v1354
        %v1356 = vpop.f32.mrb[0].mxu0
        %v1357 = vpop.f32.mrb[0].mxu0
        %v1358 = vadd.f32 %v1278, %v1357
        %v1359 = vpop.f32.mrb[0].mxu0
        %1360 = vmatprep.mubr.bf16.mxu0 %v1191
        %1361 = vmatmul.mubr.bf16.gmra.mrb[0].mxu0 %v1247
        %v1362 = vpop.f32.mrb[0].mxu0
        %v1363 = vadd.f32 %v1278, %v1362
        %v1364 = vpop.f32.mrb[0].mxu0
        %v1365 = vpop.f32.mrb[0].mxu0
        %v1366 = vadd.f32 %v1278, %v1365
        %v1367 = vpop.f32.mrb[0].mxu0
        %1368 = vmatprep.mubr.bf16.mxu0 %v1192
        %1369 = vmatmul.mubr.bf16.gmra.mrb[0].mxu0 %v1248
        %v1370 = vpop.f32.mrb[0].mxu0
        %v1371 = vadd.f32 %v1278, %v1370
        %v1372 = vpop.f32.mrb[0].mxu0
        %v1373 = vpop.f32.mrb[0].mxu0
        %v1374 = vadd.f32 %v1278, %v1373
        %v1375 = vpop.f32.mrb[0].mxu0
        %1376 = vdwg.mxu0
        %v1377 = vmax.f32 %v1315, 0.0
        %v1378 = vmax.f32 %v1318, 0.0
        %v1379 = vmax.f32 %v1323, 0.0
        %v1380 = vmax.f32 %v1326, 0.0
        %v1381 = vmax.f32 %v1331, 0.0
        %v1382 = vmax.f32 %v1334, 0.0
        %v1383 = vmax.f32 %v1339, 0.0
        %v1384 = vmax.f32 %v1342, 0.0
        %v1385 = vmax.f32 %v1347, 0.0
        %v1386 = vmax.f32 %v1350, 0.0
        %v1387 = vmax.f32 %v1355, 0.0
        %v1388 = vmax.f32 %v1358, 0.0
        %v1389 = vmax.f32 %v1363, 0.0
        %v1390 = vmax.f32 %v1366, 0.0
        %v1391 = vmax.f32 %v1371, 0.0
        %v1392 = vmax.f32 %v1374, 0.0
        %v1393 = vpack.c.bf16 %v1378, %v1377
        %v1394 = vpack.c.bf16 %v1380, %v1379
        %v1395 = vpack.c.bf16 %v1382, %v1381
        %v1396 = vpack.c.bf16 %v1384, %v1383
        %v1397 = vpack.c.bf16 %v1386, %v1385
        %v1398 = vpack.c.bf16 %v1388, %v1387
        %v1399 = vpack.c.bf16 %v1390, %v1389
        %v1400 = vpack.c.bf16 %v1392, %v1391
        %v1409 = vunpack.c.l.b16 %v1393
        %v1410 = vunpack.c.h.b16 %v1393
        %v1411 = vunpack.c.l.b16 %v1394
        %v1412 = vunpack.c.h.b16 %v1394
        %v1413 = vunpack.c.l.b16 %v1395
        %v1414 = vunpack.c.h.b16 %v1395
        %v1415 = vunpack.c.l.b16 %v1396
        %v1416 = vunpack.c.h.b16 %v1396
        %v1417 = vunpack.c.l.b16 %v1397
        %v1418 = vunpack.c.h.b16 %v1397
        %v1419 = vunpack.c.l.b16 %v1398
        %v1420 = vunpack.c.h.b16 %v1398
        %v1421 = vunpack.c.l.b16 %v1399
        %v1422 = vunpack.c.h.b16 %v1399
        %v1423 = vunpack.c.l.b16 %v1400
        %v1424 = vunpack.c.h.b16 %v1400
        %v1425 = vpack.c.b16 %v1409, %v1409
        %v1426 = vpack.c.b16 %v1410, %v1410
        %v1427 = vpack.c.b16 %v1411, %v1411
        %v1428 = vpack.c.b16 %v1412, %v1412
        %v1429 = vpack.c.b16 %v1413, %v1413
        %v1430 = vpack.c.b16 %v1414, %v1414
        %v1431 = vpack.c.b16 %v1415, %v1415
        %v1432 = vpack.c.b16 %v1416, %v1416
        %v1433 = vpack.c.b16 %v1417, %v1417
        %v1434 = vpack.c.b16 %v1418, %v1418
        %v1435 = vpack.c.b16 %v1419, %v1419
        %v1436 = vpack.c.b16 %v1420, %v1420
        %v1437 = vpack.c.b16 %v1421, %v1421
        %v1438 = vpack.c.b16 %v1422, %v1422
        %v1439 = vpack.c.b16 %v1423, %v1423
        %v1440 = vpack.c.b16 %v1424, %v1424
        %1457 = vst [vmem:[%s584] sm:$0xf] %v1425
        %1458 = vst [vmem:[%s584 + $0x4] sm:$0xf] %v1426
        %1459 = vst [vmem:[%s584 + $0x8] sm:$0xf] %v1427
        %1460 = vst [vmem:[%s584 + $0xc] sm:$0xf] %v1428
        %1461 = vst [vmem:[%s584 + $0x10] sm:$0xf] %v1429
        %1462 = vst [vmem:[%s584 + $0x14] sm:$0xf] %v1430
        %1463 = vst [vmem:[%s584 + $0x18] sm:$0xf] %v1431
        %1464 = vst [vmem:[%s584 + $0x1c] sm:$0xf] %v1432
        %1465 = vst [vmem:[%s584 + $0x20] sm:$0xf] %v1433
        %1466 = vst [vmem:[%s584 + $0x24] sm:$0xf] %v1434
        %1467 = vst [vmem:[%s584 + $0x28] sm:$0xf] %v1435
        %1468 = vst [vmem:[%s584 + $0x2c] sm:$0xf] %v1436
        %1469 = vst [vmem:[%s584 + $0x30] sm:$0xf] %v1437
        %1470 = vst [vmem:[%s584 + $0x34] sm:$0xf] %v1438
        %1471 = vst [vmem:[%s584 + $0x38] sm:$0xf] %v1439
        %1472 = vst [vmem:[%s584 + $0x3c] sm:$0xf] %v1440
        %v1473 = vlaneseq
        %v1474 = vshrl.u32 %v1473, 7
        %v1475 = vadd.s32 %v1474, 8
        %v1476 = vadd.s32 %v1474, 16
        %v1477 = vadd.s32 %v1474, 24
        %v1478 = vadd.s32 %v1474, 32
        %v1479 = vadd.s32 %v1474, 40
        %v1480 = vadd.s32 %v1474, 48
        %v1481 = vadd.s32 %v1474, 56
        %v1482 = vadd.s32 %v1474, 64
        %v1483 = vadd.s32 %v1474, 72
        %v1484 = vadd.s32 %v1474, 80
        %v1485 = vadd.s32 %v1474, 88
        %v1486 = vadd.s32 %v1474, 96
        %v1487 = vadd.s32 %v1474, 104
        %v1488 = vadd.s32 %v1474, 112
        %v1489 = vadd.s32 %v1474, 120
        %v1490 = vld [vmem:[%s520] sm:$0x1]
        %v1491 = vlaneseq
        %v1492 = vshrl.u32 %v1491, 7
        %v1493 = vsub.s32 0, %v1492
        %v1494 = vrot.slane %v1490, %v1493
        %vm1495 = vcmp.eq.s32.totalorder %v1494, %v1474
        %vm1496 = vcmp.eq.s32.totalorder %v1494, %v1475
        %vm1497 = vcmp.eq.s32.totalorder %v1494, %v1476
        %vm1498 = vcmp.eq.s32.totalorder %v1494, %v1477
        %vm1499 = vcmp.eq.s32.totalorder %v1494, %v1478
        %vm1500 = vcmp.eq.s32.totalorder %v1494, %v1479
        %vm1501 = vcmp.eq.s32.totalorder %v1494, %v1480
        %vm1502 = vcmp.eq.s32.totalorder %v1494, %v1481
        %vm1503 = vcmp.eq.s32.totalorder %v1494, %v1482
        %vm1504 = vcmp.eq.s32.totalorder %v1494, %v1483
        %vm1505 = vcmp.eq.s32.totalorder %v1494, %v1484
        %vm1506 = vcmp.eq.s32.totalorder %v1494, %v1485
        %vm1507 = vcmp.eq.s32.totalorder %v1494, %v1486
        %vm1508 = vcmp.eq.s32.totalorder %v1494, %v1487
        %vm1509 = vcmp.eq.s32.totalorder %v1494, %v1488
        %vm1510 = vcmp.eq.s32.totalorder %v1494, %v1489
        %v1511 = vsel %vm1495, 1, 0
        %v1512 = vsel %vm1496, 1, 0
        %v1513 = vsel %vm1497, 1, 0
        %v1514 = vsel %vm1498, 1, 0
        %v1515 = vsel %vm1499, 1, 0
        %v1516 = vsel %vm1500, 1, 0
        %v1517 = vsel %vm1501, 1, 0
        %v1518 = vsel %vm1502, 1, 0
        %v1519 = vsel %vm1503, 1, 0
        %v1520 = vsel %vm1504, 1, 0
        %v1521 = vsel %vm1505, 1, 0
        %v1522 = vsel %vm1506, 1, 0
        %v1523 = vsel %vm1507, 1, 0
        %v1524 = vsel %vm1508, 1, 0
        %v1525 = vsel %vm1509, 1, 0
        %v1526 = vsel %vm1510, 1, 0
        %v1527 = vcvt.s32.f32 %v1511
        %v1528 = vcvt.s32.f32 %v1512
        %v1529 = vcvt.s32.f32 %v1513
        %v1530 = vcvt.s32.f32 %v1514
        %v1531 = vcvt.s32.f32 %v1515
        %v1532 = vcvt.s32.f32 %v1516
        %v1533 = vcvt.s32.f32 %v1517
        %v1534 = vcvt.s32.f32 %v1518
        %v1535 = vcvt.s32.f32 %v1519
        %v1536 = vcvt.s32.f32 %v1520
        %v1537 = vcvt.s32.f32 %v1521
        %v1538 = vcvt.s32.f32 %v1522
        %v1539 = vcvt.s32.f32 %v1523
        %v1540 = vcvt.s32.f32 %v1524
        %v1541 = vcvt.s32.f32 %v1525
        %v1542 = vcvt.s32.f32 %v1526
        %v1543 = vpack.c.bf16 %v1528, %v1527
        %v1544 = vpack.c.bf16 %v1530, %v1529
        %v1545 = vpack.c.bf16 %v1532, %v1531
        %v1546 = vpack.c.bf16 %v1534, %v1533
        %v1547 = vpack.c.bf16 %v1536, %v1535
        %v1548 = vpack.c.bf16 %v1538, %v1537
        %v1549 = vpack.c.bf16 %v1540, %v1539
        %v1550 = vpack.c.bf16 %v1542, %v1541
        %v1551 = vld [vmem:[%s591] sm:$0xff]
        %v1552 = vld [vmem:[%s591 + $0x8] sm:$0xff]
        %v1553 = vld [vmem:[%s591 + $0x10] sm:$0xff]
        %v1554 = vld [vmem:[%s591 + $0x18] sm:$0xff]
        %v1555 = vld [vmem:[%s591 + $0x20] sm:$0xff]
        %v1556 = vld [vmem:[%s591 + $0x28] sm:$0xff]
        %v1557 = vld [vmem:[%s591 + $0x30] sm:$0xff]
        %v1558 = vld [vmem:[%s591 + $0x38] sm:$0xff]
        %v1559 = vld [vmem:[%s591 + $0x40] sm:$0xff]
        %v1560 = vld [vmem:[%s591 + $0x48] sm:$0xff]
        %v1561 = vld [vmem:[%s591 + $0x50] sm:$0xff]
        %v1562 = vld [vmem:[%s591 + $0x58] sm:$0xff]
        %v1563 = vld [vmem:[%s591 + $0x60] sm:$0xff]
        %v1564 = vld [vmem:[%s591 + $0x68] sm:$0xff]
        %v1565 = vld [vmem:[%s591 + $0x70] sm:$0xff]
        %v1566 = vld [vmem:[%s591 + $0x78] sm:$0xff]
        %1567 = vmatprep.subr.bf16.mxu0 0
        %1568 = vmatpush1.bf16.msra.mxu0 %v1393
        %1569 = vmatprep.subr.bf16.mxu0 0
        %1570 = vmatpush1.bf16.msra.mxu0 %v1394
        %1571 = vmatprep.subr.bf16.mxu0 0
        %1572 = vmatpush1.bf16.msra.mxu0 %v1395
        %1573 = vmatprep.subr.bf16.mxu0 0
        %1574 = vmatpush1.bf16.msra.mxu0 %v1396
        %1575 = vmatprep.subr.bf16.mxu0 0
        %1576 = vmatpush1.bf16.msra.mxu0 %v1397
        %1577 = vmatprep.subr.bf16.mxu0 0
        %1578 = vmatpush1.bf16.msra.mxu0 %v1398
        %1579 = vmatprep.subr.bf16.mxu0 0
        %1580 = vmatpush1.bf16.msra.mxu0 %v1399
        %1581 = vmatprep.subr.bf16.mxu0 0
        %1582 = vmatpush1.bf16.msra.mxu0 %v1400
        %1583 = vmatprep.subr.bf16.mxu0 0
        %1584 = vmatpush1.bf16.msra.mxu0 0
        %1585 = vmatprep.subr.bf16.mxu0 0
        %1586 = vmatpush1.bf16.msra.mxu0 0
        %1587 = vmatprep.subr.bf16.mxu0 0
        %1588 = vmatpush1.bf16.msra.mxu0 0
        %1589 = vmatprep.subr.bf16.mxu0 0
        %1590 = vmatpush1.bf16.msra.mxu0 0
        %1591 = vmatprep.subr.bf16.mxu0 0
        %1592 = vmatpush1.bf16.msra.mxu0 0
        %1593 = vmatprep.subr.bf16.mxu0 0
        %1594 = vmatpush1.bf16.msra.mxu0 0
        %1595 = vmatprep.subr.bf16.mxu0 0
        %1596 = vmatpush1.bf16.msra.mxu0 0
        %1597 = vmatprep.subr.bf16.mxu0 0
        %1598 = vmatpush1.bf16.msra.mxu0 0
        %1599 = vmatprep.mubr.bf16.mxu0 0
        %1600 = vmatmul.mubr.bf16.gmra.mrb[0].mxu0 %v1543
        %v1601 = vpop.f32.mrb[0].mxu0
        %v1602 = vadd.f32 0.0, %v1601
        %v1603 = vpop.f32.mrb[0].mxu0
        %v1604 = vpop.f32.mrb[0].mxu0
        %v1605 = vadd.f32 0.0, %v1604
        %v1606 = vpop.f32.mrb[0].mxu0
        %1607 = vmatprep.mubr.bf16.mxu0 0
        %1608 = vmatmul.mubr.bf16.gmra.mrb[0].mxu0 %v1544
        %v1609 = vpop.f32.mrb[0].mxu0
        %v1610 = vadd.f32 0.0, %v1609
        %v1611 = vpop.f32.mrb[0].mxu0
        %v1612 = vpop.f32.mrb[0].mxu0
        %v1613 = vadd.f32 0.0, %v1612
        %v1614 = vpop.f32.mrb[0].mxu0
        %1615 = vmatprep.mubr.bf16.mxu0 0
        %1616 = vmatmul.mubr.bf16.gmra.mrb[0].mxu0 %v1545
        %v1617 = vpop.f32.mrb[0].mxu0
        %v1618 = vadd.f32 0.0, %v1617
        %v1619 = vpop.f32.mrb[0].mxu0
        %v1620 = vpop.f32.mrb[0].mxu0
        %v1621 = vadd.f32 0.0, %v1620
        %v1622 = vpop.f32.mrb[0].mxu0
        %1623 = vmatprep.mubr.bf16.mxu0 0
        %1624 = vmatmul.mubr.bf16.gmra.mrb[0].mxu0 %v1546
        %v1625 = vpop.f32.mrb[0].mxu0
        %v1626 = vadd.f32 0.0, %v1625
        %v1627 = vpop.f32.mrb[0].mxu0
        %v1628 = vpop.f32.mrb[0].mxu0
        %v1629 = vadd.f32 0.0, %v1628
        %v1630 = vpop.f32.mrb[0].mxu0
        %1631 = vmatprep.mubr.bf16.mxu0 0
        %1632 = vmatmul.mubr.bf16.gmra.mrb[0].mxu0 %v1547
        %v1633 = vpop.f32.mrb[0].mxu0
        %v1634 = vadd.f32 0.0, %v1633
        %v1635 = vpop.f32.mrb[0].mxu0
        %v1636 = vpop.f32.mrb[0].mxu0
        %v1637 = vadd.f32 0.0, %v1636
        %v1638 = vpop.f32.mrb[0].mxu0
        %1639 = vmatprep.mubr.bf16.mxu0 0
        %1640 = vmatmul.mubr.bf16.gmra.mrb[0].mxu0 %v1548
        %v1641 = vpop.f32.mrb[0].mxu0
        %v1642 = vadd.f32 0.0, %v1641
        %v1643 = vpop.f32.mrb[0].mxu0
        %v1644 = vpop.f32.mrb[0].mxu0
        %v1645 = vadd.f32 0.0, %v1644
        %v1646 = vpop.f32.mrb[0].mxu0
        %1647 = vmatprep.mubr.bf16.mxu0 0
        %1648 = vmatmul.mubr.bf16.gmra.mrb[0].mxu0 %v1549
        %v1649 = vpop.f32.mrb[0].mxu0
        %v1650 = vadd.f32 0.0, %v1649
        %v1651 = vpop.f32.mrb[0].mxu0
        %v1652 = vpop.f32.mrb[0].mxu0
        %v1653 = vadd.f32 0.0, %v1652
        %v1654 = vpop.f32.mrb[0].mxu0
        %1655 = vmatprep.mubr.bf16.mxu0 0
        %1656 = vmatmul.mubr.bf16.gmra.mrb[0].mxu0 %v1550
        %v1657 = vpop.f32.mrb[0].mxu0
        %v1658 = vadd.f32 0.0, %v1657
        %v1659 = vpop.f32.mrb[0].mxu0
        %v1660 = vpop.f32.mrb[0].mxu0
        %v1661 = vadd.f32 0.0, %v1660
        %v1662 = vpop.f32.mrb[0].mxu0
        %1663 = vdwg.mxu0
        %v1664 = vadd.f32 %v1551, %v1602
        %v1665 = vadd.f32 %v1552, %v1605
        %v1666 = vadd.f32 %v1553, %v1610
        %v1667 = vadd.f32 %v1554, %v1613
        %v1668 = vadd.f32 %v1555, %v1618
        %v1669 = vadd.f32 %v1556, %v1621
        %v1670 = vadd.f32 %v1557, %v1626
        %v1671 = vadd.f32 %v1558, %v1629
        %v1672 = vadd.f32 %v1559, %v1634
        %v1673 = vadd.f32 %v1560, %v1637
        %v1674 = vadd.f32 %v1561, %v1642
        %v1675 = vadd.f32 %v1562, %v1645
        %v1676 = vadd.f32 %v1563, %v1650
        %v1677 = vadd.f32 %v1564, %v1653
        %v1678 = vadd.f32 %v1565, %v1658
        %v1679 = vadd.f32 %v1566, %v1661
        %1680 = vst [vmem:[%s591] sm:$0xff] %v1664
        %1681 = vst [vmem:[%s591 + $0x8] sm:$0xff] %v1665
        %1682 = vst [vmem:[%s591 + $0x10] sm:$0xff] %v1666
        %1683 = vst [vmem:[%s591 + $0x18] sm:$0xff] %v1667
        %1684 = vst [vmem:[%s591 + $0x20] sm:$0xff] %v1668
        %1685 = vst [vmem:[%s591 + $0x28] sm:$0xff] %v1669
        %1686 = vst [vmem:[%s591 + $0x30] sm:$0xff] %v1670
        %1687 = vst [vmem:[%s591 + $0x38] sm:$0xff] %v1671
        %1688 = vst [vmem:[%s591 + $0x40] sm:$0xff] %v1672
        %1689 = vst [vmem:[%s591 + $0x48] sm:$0xff] %v1673
        %1690 = vst [vmem:[%s591 + $0x50] sm:$0xff] %v1674
        %1691 = vst [vmem:[%s591 + $0x58] sm:$0xff] %v1675
        %1692 = vst [vmem:[%s591 + $0x60] sm:$0xff] %v1676
        %1693 = vst [vmem:[%s591 + $0x68] sm:$0xff] %v1677
        %1694 = vst [vmem:[%s591 + $0x70] sm:$0xff] %v1678
        %1695 = vst [vmem:[%s591 + $0x78] sm:$0xff] %v1679
        %s1696 = sand.u32 %s276, 1
        %s1697 = scalar_lea.sflag [#allocation5], %s1696
        %s1698 = sand.u32 %s276, 1
        %s1699 = smul.addr %s1698, 64
        %s1700 = scalar_lea.vmem [#allocation18], %s1699
        %s1701 = sand.u32 %s302, 1
        %s1702 = scalar_lea.sflag [#allocation20], %s1701
        %s1703 = sand.u32 %s302, 1
        %s1704 = smul.addr %s1703, 128
        %s1705 = scalar_lea.vmem [#allocation19], %s1704
        // Predicated region
        $region97: #{tpu_custom_call.1} parent=55 // pred_check
          %p1706 = pneg %p286
        $region98: #{tpu_custom_call.1} parent=55 // pred_check_branch
          %1708 = sbr.rel (%p1706) target = $region100
        $region99: #{tpu_custom_call.1} parent=55 // pred_region
          %s1709 = sadd.s32 %s41, %s42
          %s1710 = smul.u32 16, %s1709
          %s1712 = ssub.s32 1024, 1024
          %1713 = vsyncadd %s1697, %s1712
          %s1714 = smul.addr %s1710, 64
          %s1715 = scalar_lea.hbm %s9, %s1714
          %s1716 = sshll.u32 %s1700, 4
          %s1717 = int_to_ptr.vmem [resolvable:$true] %s1716
          %1722 = dma.vmem_to_hbm [thread:$0]  %s1717, 1024, %s1715, %s1697, 64, 64, 4
        $region100: #{tpu_custom_call.1} parent=55 // pred_fallthru
          _
        // Predicated region
        $region101: #{tpu_custom_call.1} parent=55 // pred_check
          %p1723 = pneg %p312
        $region102: #{tpu_custom_call.1} parent=55 // pred_check_branch
          %1725 = sbr.rel (%p1723) target = $region104
        $region103: #{tpu_custom_call.1} parent=55 // pred_region
          %s1726 = smul.u32 16, %s41
          %s1728 = ssub.s32 2048, 2048
          %1729 = vsyncadd %s1702, %s1728
          %s1730 = smul.addr %s1726, 128
          %s1731 = scalar_lea.hbm %s10, %s1730
          %s1732 = sshll.u32 %s1705, 4
          %s1733 = int_to_ptr.vmem [resolvable:$true] %s1732
          %1738 = dma.vmem_to_hbm [thread:$0]  %s1733, 2048, %s1731, %s1702, 128, 128, 8
        $region104: #{tpu_custom_call.1} parent=55 // pred_fallthru
          _
      $region56: #{tpu_custom_call.1} parent=5 // pred_fallthru
        _
      %p1739 = scmp.le.s32.totalorder 2, %s32
      // Predicated region
      $region105: #{tpu_custom_call.1} parent=5 // pred_check
        %p1740 = pneg %p1739
      $region106: #{tpu_custom_call.1} parent=5 // pred_check_branch
        %1742 = sbr.rel (%p1740) target = $region108
      $region107: #{tpu_custom_call.1} parent=5 // pred_region
        %s1743 = ssub.s32 %s32, 2
        // Predicated region
        $region109: #{tpu_custom_call.1} parent=107 // pred_check
          %p1744 = pneg %p292
        $region110: #{tpu_custom_call.1} parent=107 // pred_check_branch
          %1746 = sbr.rel (%p1744) target = $region112
        $region111: #{tpu_custom_call.1} parent=107 // pred_region
          %s1747 = sand.u32 %s277, 1
          %s1748 = scalar_lea.sflag [#allocation5], %s1747
          %s1749 = sand.u32 %s277, 1
          %s1750 = smul.addr %s1749, 64
          %s1751 = scalar_lea.vmem [#allocation18], %s1750
          %1752 = dma.done %s1748, 1024
        $region112: #{tpu_custom_call.1} parent=107 // pred_fallthru
          _
        // Predicated region
        $region113: #{tpu_custom_call.1} parent=107 // pred_check
          %p1753 = pneg %p318
        $region114: #{tpu_custom_call.1} parent=107 // pred_check_branch
          %1755 = sbr.rel (%p1753) target = $region116
        $region115: #{tpu_custom_call.1} parent=107 // pred_region
          %s1756 = sand.u32 %s303, 1
          %s1757 = scalar_lea.sflag [#allocation20], %s1756
          %s1758 = sand.u32 %s303, 1
          %s1759 = smul.addr %s1758, 128
          %s1760 = scalar_lea.vmem [#allocation19], %s1759
          %1761 = dma.done %s1757, 2048
        $region116: #{tpu_custom_call.1} parent=107 // pred_fallthru
          _
      $region108: #{tpu_custom_call.1} parent=5 // pred_fallthru
        _
    $region6: #{tpu_custom_call.1} parent=1 // loop_footer
      %s36 = sadd.s32 1, %s32
    $region7: #{tpu_custom_call.1} parent=1 // loop_footer_branch
      %31 = sbr.rel target = $region3
    $region8: #{tpu_custom_call.1} parent=1 // loop_exit
      _
    %1762 = vsyncpa [#allocation4], 1
    %s1763 = scalar_lea.sflag [#allocation4], 1
    %1764 = vsyncpa %s1763, 1
    %1765 = vsyncpa [#allocation7], 1
    %s1766 = scalar_lea.sflag [#allocation7], 1
    %1767 = vsyncpa %s1766, 1
    %1768 = vsyncpa [#allocation10], 1
    %s1769 = scalar_lea.sflag [#allocation10], 1
    %1770 = vsyncpa %s1769, 1
    %1771 = vsyncpa [#allocation13], 1
    %1772 = vsyncpa [#allocation16], 1
    %1773 = vsyncpa [#allocation5], 1
    %s1774 = scalar_lea.sflag [#allocation5], 1
    %1775 = vsyncpa %s1774, 1
    %1776 = vsyncpa [#allocation20], 1
    %s1777 = scalar_lea.sflag [#allocation20], 1
    %1778 = vsyncpa %s1777, 1

</llo_original>
